<compile_context>
chip_gen: v7x
topology: tpu7x:2x2x1
jax: 0.10.0
libtpu: 0.0.40
codegen_flags: <defaults>
</compile_context>

<pallas_src>
from math import sqrt
from functools import partial

import jax
import jax.numpy as jnp
from jax import lax
from jax.experimental import pallas as pl
from jax.experimental.pallas import tpu as pltpu


def _mha_kernel(x_ref, wq_ref, bq_ref, wk_ref, bk_ref, wv_ref, bv_ref,
                wo_ref, bo_ref, out_ref, o_scratch,
                *, num_heads, head_dim, seq_len, batch_per_step, inv_divider):
    """One grid step == `batch_per_step` batch elements, tokens flattened.

    x_ref:     (Bt*N, E)  flattened tokens for this batch tile
    w*_ref:    (E, E)     pre-transposed projection weights (constant index)
    b*_ref:    (1, E)     biases (f32)
    out_ref:   (Bt*N, E)
    o_scratch: (Bt*N, E)  f32 VMEM scratch holding the "concatenated" head outs
    """
    mm_dtype = wq_ref.dtype          # matmul operand dtype (f32, or bf16 opt-in)
    x = x_ref[...].astype(mm_dtype)  # (Bt*N, E)

    # Q / K / V projections over ALL tokens of the tile at once (big-M matmuls).
    q = jnp.dot(x, wq_ref[...], preferred_element_type=jnp.float32) + bq_ref[...]
    k = jnp.dot(x, wk_ref[...], preferred_element_type=jnp.float32) + bk_ref[...]
    v = jnp.dot(x, wv_ref[...], preferred_element_type=jnp.float32) + bv_ref[...]

    # Per (batch-element, head) attention; static, fully unrolled loops.
    # Head outputs are written straight into the scratch slab at their lane
    # offset -- no jnp.concatenate / relayout.
    # TODO(synk): for large N, add a query-tile grid axis and stream K/V blocks
    # (flash-style online softmax) instead of materializing the (N, N) energy.
    for b in range(batch_per_step):
        rows = slice(b * seq_len, (b + 1) * seq_len)
        for h in range(num_heads):
            cols = slice(h * head_dim, (h + 1) * head_dim)
            qh = q[rows, cols].astype(mm_dtype)   # (N, hd)
            kh = k[rows, cols].astype(mm_dtype)   # (N, hd)
            vh = v[rows, cols].astype(mm_dtype)   # (N, hd)

            # energy = qh @ kh.T, transpose absorbed into the MXU matmul.
            energy = lax.dot_general(
                qh, kh, (((1,), (1,)), ((), ())),
                preferred_element_type=jnp.float32)          # (N, N)

            # Numerically-stable softmax; the 1/sum and the reference's
            # post-softmax 1/sqrt(E) are folded into one per-row scale applied
            # AFTER the PV matmul (no (N, N) divides).
            m = jnp.max(energy, axis=-1, keepdims=True)
            e = jnp.exp(energy - m)
            s = jnp.sum(e, axis=-1, keepdims=True)           # (N, 1)

            oh = jnp.dot(e.astype(mm_dtype), vh,
                         preferred_element_type=jnp.float32)  # (N, hd)
            o_scratch[rows, cols] = oh * (inv_divider / s)

    # Final output projection: a single wide-K (K = E) MXU matmul over the tile.
    y = jnp.dot(o_scratch[...].astype(mm_dtype), wo_ref[...],
                preferred_element_type=jnp.float32) + bo_ref[...]
    out_ref[...] = y.astype(out_ref.dtype)


def _pick_batch_tile(B, N, E, vmem_budget_bytes=8 * 1024 * 1024):
    """Largest divisor of B whose per-step activation footprint fits the budget."""
    per_b = (6 * N * E + 2 * N * N) * 4          # x,q,k,v,scratch,out + energy tmp
    bt = max(1, min(B, vmem_budget_bytes // max(per_b, 1)))
    while B % bt:
        bt -= 1
    return int(bt)


def multi_head_attention(x, params, *, num_heads, batch_tile=None,
                         matmul_dtype=None, single_buffer_weights=False):
    """x: (B, N, E).  params: dict of pre-transposed weights / biases.

    matmul_dtype: optionally jnp.bfloat16 to feed the MXU bf16 operands on
        v6e/v7x (accumulation stays f32; loosen test tolerance if used).
    single_buffer_weights: use pl.Buffered(1) on the constant-index (E, E)
        weight blocks -- recommended for very large E to halve weight VMEM.
    """
    B, N, E = x.shape
    assert E % num_heads == 0
    head_dim = E // num_heads

    if batch_tile is None:
        batch_tile = _pick_batch_tile(B, N, E)
    assert B % batch_tile == 0
    Bt = batch_tile

    mm_dtype = x.dtype if matmul_dtype is None else matmul_dtype

    wq = params["wq_t"].astype(mm_dtype)
    wk = params["wk_t"].astype(mm_dtype)
    wv = params["wv_t"].astype(mm_dtype)
    wo = params["wo_t"].astype(mm_dtype)
    bq = params["bq"].reshape(1, E).astype(jnp.float32)
    bk = params["bk"].reshape(1, E).astype(jnp.float32)
    bv = params["bv"].reshape(1, E).astype(jnp.float32)
    bo = params["bo"].reshape(1, E).astype(jnp.float32)

    # Flatten tokens in the wrapper so the kernel sees a 2-D (Bt*N, E) block.
    x2 = x.reshape(B * N, E).astype(mm_dtype)

    kernel = partial(_mha_kernel, num_heads=num_heads, head_dim=head_dim,
                     seq_len=N, batch_per_step=Bt, inv_divider=1.0 / sqrt(E))

    if single_buffer_weights:
        weight_spec = pl.BlockSpec((E, E), lambda i: (0, 0),
                                   pipeline_mode=pl.Buffered(1))
    else:
        weight_spec = pl.BlockSpec((E, E), lambda i: (0, 0))
    bias_spec = pl.BlockSpec((1, E), lambda i: (0, 0))
    tok_spec = pl.BlockSpec((Bt * N, E), lambda i: (i, 0))

    # Explicit VMEM budget: 4 weight blocks (x2 buffers unless single-buffered)
    # + biases + x/out blocks (double-buffered) + q/k/v + scratch + energy tmp.
    itemsize = jnp.dtype(mm_dtype).itemsize
    weight_bufs = 1 if single_buffer_weights else 2
    weight_bytes = 4 * weight_bufs * E * E * itemsize + 4 * E * 4
    act_bytes = (4 * Bt * N * E * itemsize      # x + out blocks, double-buffered
                 + 4 * Bt * N * E * 4           # q, k, v, scratch (f32)
                 + 2 * N * N * 4)               # energy temporaries
    vmem_limit = int(min(64 * 1024 * 1024,
                         max(32 * 1024 * 1024, 2 * (weight_bytes + act_bytes))))

    out = pl.pallas_call(
        kernel,
        out_shape=jax.ShapeDtypeStruct((B * N, E), x.dtype),
        grid_spec=pltpu.PrefetchScalarGridSpec(
            num_scalar_prefetch=0,
            grid=(B // Bt,),
            in_specs=[
                tok_spec,                  # x (flattened tokens)
                weight_spec, bias_spec,    # Q
                weight_spec, bias_spec,    # K
                weight_spec, bias_spec,    # V
                weight_spec, bias_spec,    # final
            ],
            out_specs=tok_spec,
            scratch_shapes=[pltpu.VMEM((Bt * N, E), jnp.float32)]),
        compiler_params=pltpu.CompilerParams(
            dimension_semantics=("parallel",),
            vmem_limit_bytes=vmem_limit),
    )(x2, wq, bq, wk, bk, wv, bv, wo, bo)

    return out.reshape(B, N, E)


def _reference_mha(x, params, *, num_heads):
    """Pure-JAX reference mirroring the PyTorch forward exactly."""
    B, N, E = x.shape
    hd = E // num_heads
    divider = sqrt(E)

    def linear(t, wt, b):
        return t @ wt + b

    q = linear(x, params["wq_t"], params["bq"]).reshape(B, N, num_heads, hd)
    k = linear(x, params["wk_t"], params["bk"]).reshape(B, N, num_heads, hd)
    v = linear(x, params["wv_t"], params["bv"]).reshape(B, N, num_heads, hd)

    energy = jnp.einsum("bqhe,bkhe->bqhk", q, k)
    attn = jax.nn.softmax(energy, axis=-1)
    out = jnp.einsum("bihv,bvhd->bihd", attn / divider, v)
    out = out.reshape(B, N, E)
    return linear(out, params["wo_t"], params["bo"])


def init_params(key, embed_size):
    """Deterministic synthetic parameters (uniform, Linear-style fan-in scale)."""
    ks = jax.random.split(key, 8)
    bound = 1.0 / sqrt(embed_size)

    def u(k, shape):
        return jax.random.uniform(k, shape, jnp.float32, -bound, bound)

    # Weights are stored pre-transposed: (in, out) so y = x @ W_t + b.
    return {
        "wq_t": u(ks[0], (embed_size, embed_size)), "bq": u(ks[1], (embed_size,)),
        "wk_t": u(ks[2], (embed_size, embed_size)), "bk": u(ks[3], (embed_size,)),
        "wv_t": u(ks[4], (embed_size, embed_size)), "bv": u(ks[5], (embed_size,)),
        "wo_t": u(ks[6], (embed_size, embed_size)), "bo": u(ks[7], (embed_size,)),
    }


if __name__ == "__main__":
    B, N, E, H = 2, 8, 32, 4

    key = jax.random.PRNGKey(0)
    kx, kp = jax.random.split(key)
    x = jax.random.normal(kx, (B, N, E), jnp.float32)
    params = init_params(kp, E)

    out = multi_head_attention(x, params, num_heads=H)
    out = jax.block_until_ready(out)

    ref = _reference_mha(x, params, num_heads=H)
    assert out.shape == (B, N, E)
    assert jnp.allclose(out, ref, atol=1e-5, rtol=1e-5), \
        f"max err {jnp.max(jnp.abs(out - ref))}"

    print("KERNEL_OK")
</pallas_src>

<mosaic_0001>
module attributes {stable_mosaic.version = 11 : i64} {
  func.func @_mha_kernel(%arg0: i32, %arg1: memref<16x32xf32, #tpu.memory_space<vmem>>, %arg2: memref<32x32xf32, #tpu.memory_space<vmem>>, %arg3: memref<1x32xf32, #tpu.memory_space<vmem>>, %arg4: memref<32x32xf32, #tpu.memory_space<vmem>>, %arg5: memref<1x32xf32, #tpu.memory_space<vmem>>, %arg6: memref<32x32xf32, #tpu.memory_space<vmem>>, %arg7: memref<1x32xf32, #tpu.memory_space<vmem>>, %arg8: memref<32x32xf32, #tpu.memory_space<vmem>>, %arg9: memref<1x32xf32, #tpu.memory_space<vmem>>, %arg10: memref<16x32xf32, #tpu.memory_space<vmem>>, %arg11: memref<16x32xf32, #tpu.memory_space<vmem>>) attributes {dimension_semantics = [#tpu.dimension_semantics<parallel>], iteration_bounds = array<i64: 1>, scalar_prefetch = 0 : i64, scratch_operands = 1 : i64, tpu.core_type = #tpu.core_type<tc>, window_params = [{transform_indices = @transform_0, window_bounds = array<i64: 16, 32>}, {pipeline_mode = #tpu.pipeline_mode<synchronous>, transform_indices = @transform_1, window_bounds = array<i64: 32, 32>}, {pipeline_mode = #tpu.pipeline_mode<synchronous>, transform_indices = @transform_2, window_bounds = array<i64: 1, 32>}, {pipeline_mode = #tpu.pipeline_mode<synchronous>, transform_indices = @transform_3, window_bounds = array<i64: 32, 32>}, {pipeline_mode = #tpu.pipeline_mode<synchronous>, transform_indices = @transform_4, window_bounds = array<i64: 1, 32>}, {pipeline_mode = #tpu.pipeline_mode<synchronous>, transform_indices = @transform_5, window_bounds = array<i64: 32, 32>}, {pipeline_mode = #tpu.pipeline_mode<synchronous>, transform_indices = @transform_6, window_bounds = array<i64: 1, 32>}, {pipeline_mode = #tpu.pipeline_mode<synchronous>, transform_indices = @transform_7, window_bounds = array<i64: 32, 32>}, {pipeline_mode = #tpu.pipeline_mode<synchronous>, transform_indices = @transform_8, window_bounds = array<i64: 1, 32>}, {transform_indices = @transform_9, window_bounds = array<i64: 16, 32>}]} {
    %c0 = arith.constant 0 : index
    %c0_0 = arith.constant 0 : index
    %0 = vector.load %arg1[%c0, %c0_0] : memref<16x32xf32, #tpu.memory_space<vmem>>, vector<16x32xf32>
    %c0_1 = arith.constant 0 : index
    %c0_2 = arith.constant 0 : index
    %1 = vector.load %arg2[%c0_1, %c0_2] : memref<32x32xf32, #tpu.memory_space<vmem>>, vector<32x32xf32>
    %cst = arith.constant dense<0.000000e+00> : vector<16x32xf32>
    %2 = tpu.matmul %0, %1, %cst {dimension_numbers = #tpu.dot_dimension_numbers<[1], [0], [0], [1], [0, 0, 1, 1], [], []>} : vector<16x32xf32>, vector<32x32xf32>, vector<16x32xf32> -> vector<16x32xf32>
    %c0_3 = arith.constant 0 : index
    %c0_4 = arith.constant 0 : index
    %3 = vector.load %arg3[%c0_3, %c0_4] : memref<1x32xf32, #tpu.memory_space<vmem>>, vector<1x32xf32>
    %4 = vector.broadcast %3 : vector<1x32xf32> to vector<16x32xf32>
    %5 = arith.addf %2, %4 : vector<16x32xf32>
    %c0_5 = arith.constant 0 : index
    %c0_6 = arith.constant 0 : index
    %6 = vector.load %arg4[%c0_5, %c0_6] : memref<32x32xf32, #tpu.memory_space<vmem>>, vector<32x32xf32>
    %cst_7 = arith.constant dense<0.000000e+00> : vector<16x32xf32>
    %7 = tpu.matmul %0, %6, %cst_7 {dimension_numbers = #tpu.dot_dimension_numbers<[1], [0], [0], [1], [0, 0, 1, 1], [], []>} : vector<16x32xf32>, vector<32x32xf32>, vector<16x32xf32> -> vector<16x32xf32>
    %c0_8 = arith.constant 0 : index
    %c0_9 = arith.constant 0 : index
    %8 = vector.load %arg5[%c0_8, %c0_9] : memref<1x32xf32, #tpu.memory_space<vmem>>, vector<1x32xf32>
    %9 = vector.broadcast %8 : vector<1x32xf32> to vector<16x32xf32>
    %10 = arith.addf %7, %9 : vector<16x32xf32>
    %c0_10 = arith.constant 0 : index
    %c0_11 = arith.constant 0 : index
    %11 = vector.load %arg6[%c0_10, %c0_11] : memref<32x32xf32, #tpu.memory_space<vmem>>, vector<32x32xf32>
    %cst_12 = arith.constant dense<0.000000e+00> : vector<16x32xf32>
    %12 = tpu.matmul %0, %11, %cst_12 {dimension_numbers = #tpu.dot_dimension_numbers<[1], [0], [0], [1], [0, 0, 1, 1], [], []>} : vector<16x32xf32>, vector<32x32xf32>, vector<16x32xf32> -> vector<16x32xf32>
    %c0_13 = arith.constant 0 : index
    %c0_14 = arith.constant 0 : index
    %13 = vector.load %arg7[%c0_13, %c0_14] : memref<1x32xf32, #tpu.memory_space<vmem>>, vector<1x32xf32>
    %14 = vector.broadcast %13 : vector<1x32xf32> to vector<16x32xf32>
    %15 = arith.addf %12, %14 : vector<16x32xf32>
    %16 = vector.extract_strided_slice %5 {offsets = [0, 0], sizes = [8, 8], strides = [1, 1]} : vector<16x32xf32> to vector<8x8xf32>
    %17 = vector.extract_strided_slice %10 {offsets = [0, 0], sizes = [8, 8], strides = [1, 1]} : vector<16x32xf32> to vector<8x8xf32>
    %18 = vector.extract_strided_slice %15 {offsets = [0, 0], sizes = [8, 8], strides = [1, 1]} : vector<16x32xf32> to vector<8x8xf32>
    %cst_15 = arith.constant dense<0.000000e+00> : vector<8x8xf32>
    %19 = tpu.matmul %16, %17, %cst_15 {dimension_numbers = #tpu.dot_dimension_numbers<[1], [1], [0], [0], [0, 0, 1, 0], [], []>} : vector<8x8xf32>, vector<8x8xf32>, vector<8x8xf32> -> vector<8x8xf32>
    %cst_16 = arith.constant dense<0xFF800000> : vector<8xf32>
    %20 = vector.multi_reduction <maximumf>, %19, %cst_16 [1] : vector<8x8xf32> to vector<8xf32>
    %21 = vector.shape_cast %20 : vector<8xf32> to vector<8x1xf32>
    %22 = vector.broadcast %21 : vector<8x1xf32> to vector<8x8xf32>
    %23 = arith.subf %19, %22 : vector<8x8xf32>
    %24 = math.exp %23 : vector<8x8xf32>
    %cst_17 = arith.constant dense<0.000000e+00> : vector<8xf32>
    %25 = vector.multi_reduction <add>, %24, %cst_17 [1] : vector<8x8xf32> to vector<8xf32>
    %26 = vector.shape_cast %25 : vector<8xf32> to vector<8x1xf32>
    %cst_18 = arith.constant dense<0.000000e+00> : vector<8x8xf32>
    %27 = tpu.matmul %24, %18, %cst_18 {dimension_numbers = #tpu.dot_dimension_numbers<[1], [0], [0], [1], [0, 0, 1, 1], [], []>} : vector<8x8xf32>, vector<8x8xf32>, vector<8x8xf32> -> vector<8x8xf32>
    %cst_19 = arith.constant 0.176776692 : f32
    %28 = vector.broadcast %cst_19 : f32 to vector<8x1xf32>
    %29 = arith.divf %28, %26 : vector<8x1xf32>
    %30 = vector.broadcast %29 : vector<8x1xf32> to vector<8x8xf32>
    %31 = arith.mulf %27, %30 : vector<8x8xf32>
    %c0_20 = arith.constant 0 : index
    %c0_21 = arith.constant 0 : index
    %32 = vector.load %arg11[%c0_20, %c0_21] : memref<16x32xf32, #tpu.memory_space<vmem>>, vector<8x8xf32>
    tpu.vector_store %arg11[%c0_20, %c0_21], %31 {strides = array<i32>} : memref<16x32xf32, #tpu.memory_space<vmem>>, vector<8x8xf32>,
    %33 = vector.extract_strided_slice %5 {offsets = [0, 8], sizes = [8, 8], strides = [1, 1]} : vector<16x32xf32> to vector<8x8xf32>
    %34 = vector.extract_strided_slice %10 {offsets = [0, 8], sizes = [8, 8], strides = [1, 1]} : vector<16x32xf32> to vector<8x8xf32>
    %35 = vector.extract_strided_slice %15 {offsets = [0, 8], sizes = [8, 8], strides = [1, 1]} : vector<16x32xf32> to vector<8x8xf32>
    %cst_22 = arith.constant dense<0.000000e+00> : vector<8x8xf32>
    %36 = tpu.matmul %33, %34, %cst_22 {dimension_numbers = #tpu.dot_dimension_numbers<[1], [1], [0], [0], [0, 0, 1, 0], [], []>} : vector<8x8xf32>, vector<8x8xf32>, vector<8x8xf32> -> vector<8x8xf32>
    %cst_23 = arith.constant dense<0xFF800000> : vector<8xf32>
    %37 = vector.multi_reduction <maximumf>, %36, %cst_23 [1] : vector<8x8xf32> to vector<8xf32>
    %38 = vector.shape_cast %37 : vector<8xf32> to vector<8x1xf32>
    %39 = vector.broadcast %38 : vector<8x1xf32> to vector<8x8xf32>
    %40 = arith.subf %36, %39 : vector<8x8xf32>
    %41 = math.exp %40 : vector<8x8xf32>
    %cst_24 = arith.constant dense<0.000000e+00> : vector<8xf32>
    %42 = vector.multi_reduction <add>, %41, %cst_24 [1] : vector<8x8xf32> to vector<8xf32>
    %43 = vector.shape_cast %42 : vector<8xf32> to vector<8x1xf32>
    %cst_25 = arith.constant dense<0.000000e+00> : vector<8x8xf32>
    %44 = tpu.matmul %41, %35, %cst_25 {dimension_numbers = #tpu.dot_dimension_numbers<[1], [0], [0], [1], [0, 0, 1, 1], [], []>} : vector<8x8xf32>, vector<8x8xf32>, vector<8x8xf32> -> vector<8x8xf32>
    %cst_26 = arith.constant 0.176776692 : f32
    %45 = vector.broadcast %cst_26 : f32 to vector<8x1xf32>
    %46 = arith.divf %45, %43 : vector<8x1xf32>
    %47 = vector.broadcast %46 : vector<8x1xf32> to vector<8x8xf32>
    %48 = arith.mulf %44, %47 : vector<8x8xf32>
    %c0_27 = arith.constant 0 : index
    %c8 = arith.constant 8 : index
    %49 = vector.load %arg11[%c0_27, %c8] : memref<16x32xf32, #tpu.memory_space<vmem>>, vector<8x8xf32>
    tpu.vector_store %arg11[%c0_27, %c8], %48 {strides = array<i32>} : memref<16x32xf32, #tpu.memory_space<vmem>>, vector<8x8xf32>,
    %50 = vector.extract_strided_slice %5 {offsets = [0, 16], sizes = [8, 8], strides = [1, 1]} : vector<16x32xf32> to vector<8x8xf32>
    %51 = vector.extract_strided_slice %10 {offsets = [0, 16], sizes = [8, 8], strides = [1, 1]} : vector<16x32xf32> to vector<8x8xf32>
    %52 = vector.extract_strided_slice %15 {offsets = [0, 16], sizes = [8, 8], strides = [1, 1]} : vector<16x32xf32> to vector<8x8xf32>
    %cst_28 = arith.constant dense<0.000000e+00> : vector<8x8xf32>
    %53 = tpu.matmul %50, %51, %cst_28 {dimension_numbers = #tpu.dot_dimension_numbers<[1], [1], [0], [0], [0, 0, 1, 0], [], []>} : vector<8x8xf32>, vector<8x8xf32>, vector<8x8xf32> -> vector<8x8xf32>
    %cst_29 = arith.constant dense<0xFF800000> : vector<8xf32>
    %54 = vector.multi_reduction <maximumf>, %53, %cst_29 [1] : vector<8x8xf32> to vector<8xf32>
    %55 = vector.shape_cast %54 : vector<8xf32> to vector<8x1xf32>
    %56 = vector.broadcast %55 : vector<8x1xf32> to vector<8x8xf32>
    %57 = arith.subf %53, %56 : vector<8x8xf32>
    %58 = math.exp %57 : vector<8x8xf32>
    %cst_30 = arith.constant dense<0.000000e+00> : vector<8xf32>
    %59 = vector.multi_reduction <add>, %58, %cst_30 [1] : vector<8x8xf32> to vector<8xf32>
    %60 = vector.shape_cast %59 : vector<8xf32> to vector<8x1xf32>
    %cst_31 = arith.constant dense<0.000000e+00> : vector<8x8xf32>
    %61 = tpu.matmul %58, %52, %cst_31 {dimension_numbers = #tpu.dot_dimension_numbers<[1], [0], [0], [1], [0, 0, 1, 1], [], []>} : vector<8x8xf32>, vector<8x8xf32>, vector<8x8xf32> -> vector<8x8xf32>
    %cst_32 = arith.constant 0.176776692 : f32
    %62 = vector.broadcast %cst_32 : f32 to vector<8x1xf32>
    %63 = arith.divf %62, %60 : vector<8x1xf32>
    %64 = vector.broadcast %63 : vector<8x1xf32> to vector<8x8xf32>
    %65 = arith.mulf %61, %64 : vector<8x8xf32>
    %c0_33 = arith.constant 0 : index
    %c16 = arith.constant 16 : index
    %66 = vector.load %arg11[%c0_33, %c16] : memref<16x32xf32, #tpu.memory_space<vmem>>, vector<8x8xf32>
    tpu.vector_store %arg11[%c0_33, %c16], %65 {strides = array<i32>} : memref<16x32xf32, #tpu.memory_space<vmem>>, vector<8x8xf32>,
    %67 = vector.extract_strided_slice %5 {offsets = [0, 24], sizes = [8, 8], strides = [1, 1]} : vector<16x32xf32> to vector<8x8xf32>
    %68 = vector.extract_strided_slice %10 {offsets = [0, 24], sizes = [8, 8], strides = [1, 1]} : vector<16x32xf32> to vector<8x8xf32>
    %69 = vector.extract_strided_slice %15 {offsets = [0, 24], sizes = [8, 8], strides = [1, 1]} : vector<16x32xf32> to vector<8x8xf32>
    %cst_34 = arith.constant dense<0.000000e+00> : vector<8x8xf32>
    %70 = tpu.matmul %67, %68, %cst_34 {dimension_numbers = #tpu.dot_dimension_numbers<[1], [1], [0], [0], [0, 0, 1, 0], [], []>} : vector<8x8xf32>, vector<8x8xf32>, vector<8x8xf32> -> vector<8x8xf32>
    %cst_35 = arith.constant dense<0xFF800000> : vector<8xf32>
    %71 = vector.multi_reduction <maximumf>, %70, %cst_35 [1] : vector<8x8xf32> to vector<8xf32>
    %72 = vector.shape_cast %71 : vector<8xf32> to vector<8x1xf32>
    %73 = vector.broadcast %72 : vector<8x1xf32> to vector<8x8xf32>
    %74 = arith.subf %70, %73 : vector<8x8xf32>
    %75 = math.exp %74 : vector<8x8xf32>
    %cst_36 = arith.constant dense<0.000000e+00> : vector<8xf32>
    %76 = vector.multi_reduction <add>, %75, %cst_36 [1] : vector<8x8xf32> to vector<8xf32>
    %77 = vector.shape_cast %76 : vector<8xf32> to vector<8x1xf32>
    %cst_37 = arith.constant dense<0.000000e+00> : vector<8x8xf32>
    %78 = tpu.matmul %75, %69, %cst_37 {dimension_numbers = #tpu.dot_dimension_numbers<[1], [0], [0], [1], [0, 0, 1, 1], [], []>} : vector<8x8xf32>, vector<8x8xf32>, vector<8x8xf32> -> vector<8x8xf32>
    %cst_38 = arith.constant 0.176776692 : f32
    %79 = vector.broadcast %cst_38 : f32 to vector<8x1xf32>
    %80 = arith.divf %79, %77 : vector<8x1xf32>
    %81 = vector.broadcast %80 : vector<8x1xf32> to vector<8x8xf32>
    %82 = arith.mulf %78, %81 : vector<8x8xf32>
    %c0_39 = arith.constant 0 : index
    %c24 = arith.constant 24 : index
    %83 = vector.load %arg11[%c0_39, %c24] : memref<16x32xf32, #tpu.memory_space<vmem>>, vector<8x8xf32>
    tpu.vector_store %arg11[%c0_39, %c24], %82 {strides = array<i32>} : memref<16x32xf32, #tpu.memory_space<vmem>>, vector<8x8xf32>,
    %84 = vector.extract_strided_slice %5 {offsets = [8, 0], sizes = [8, 8], strides = [1, 1]} : vector<16x32xf32> to vector<8x8xf32>
    %85 = vector.extract_strided_slice %10 {offsets = [8, 0], sizes = [8, 8], strides = [1, 1]} : vector<16x32xf32> to vector<8x8xf32>
    %86 = vector.extract_strided_slice %15 {offsets = [8, 0], sizes = [8, 8], strides = [1, 1]} : vector<16x32xf32> to vector<8x8xf32>
    %cst_40 = arith.constant dense<0.000000e+00> : vector<8x8xf32>
    %87 = tpu.matmul %84, %85, %cst_40 {dimension_numbers = #tpu.dot_dimension_numbers<[1], [1], [0], [0], [0, 0, 1, 0], [], []>} : vector<8x8xf32>, vector<8x8xf32>, vector<8x8xf32> -> vector<8x8xf32>
    %cst_41 = arith.constant dense<0xFF800000> : vector<8xf32>
    %88 = vector.multi_reduction <maximumf>, %87, %cst_41 [1] : vector<8x8xf32> to vector<8xf32>
    %89 = vector.shape_cast %88 : vector<8xf32> to vector<8x1xf32>
    %90 = vector.broadcast %89 : vector<8x1xf32> to vector<8x8xf32>
    %91 = arith.subf %87, %90 : vector<8x8xf32>
    %92 = math.exp %91 : vector<8x8xf32>
    %cst_42 = arith.constant dense<0.000000e+00> : vector<8xf32>
    %93 = vector.multi_reduction <add>, %92, %cst_42 [1] : vector<8x8xf32> to vector<8xf32>
    %94 = vector.shape_cast %93 : vector<8xf32> to vector<8x1xf32>
    %cst_43 = arith.constant dense<0.000000e+00> : vector<8x8xf32>
    %95 = tpu.matmul %92, %86, %cst_43 {dimension_numbers = #tpu.dot_dimension_numbers<[1], [0], [0], [1], [0, 0, 1, 1], [], []>} : vector<8x8xf32>, vector<8x8xf32>, vector<8x8xf32> -> vector<8x8xf32>
    %cst_44 = arith.constant 0.176776692 : f32
    %96 = vector.broadcast %cst_44 : f32 to vector<8x1xf32>
    %97 = arith.divf %96, %94 : vector<8x1xf32>
    %98 = vector.broadcast %97 : vector<8x1xf32> to vector<8x8xf32>
    %99 = arith.mulf %95, %98 : vector<8x8xf32>
    %c8_45 = arith.constant 8 : index
    %c0_46 = arith.constant 0 : index
    %100 = vector.load %arg11[%c8_45, %c0_46] : memref<16x32xf32, #tpu.memory_space<vmem>>, vector<8x8xf32>
    tpu.vector_store %arg11[%c8_45, %c0_46], %99 {strides = array<i32>} : memref<16x32xf32, #tpu.memory_space<vmem>>, vector<8x8xf32>,
    %101 = vector.extract_strided_slice %5 {offsets = [8, 8], sizes = [8, 8], strides = [1, 1]} : vector<16x32xf32> to vector<8x8xf32>
    %102 = vector.extract_strided_slice %10 {offsets = [8, 8], sizes = [8, 8], strides = [1, 1]} : vector<16x32xf32> to vector<8x8xf32>
    %103 = vector.extract_strided_slice %15 {offsets = [8, 8], sizes = [8, 8], strides = [1, 1]} : vector<16x32xf32> to vector<8x8xf32>
    %cst_47 = arith.constant dense<0.000000e+00> : vector<8x8xf32>
    %104 = tpu.matmul %101, %102, %cst_47 {dimension_numbers = #tpu.dot_dimension_numbers<[1], [1], [0], [0], [0, 0, 1, 0], [], []>} : vector<8x8xf32>, vector<8x8xf32>, vector<8x8xf32> -> vector<8x8xf32>
    %cst_48 = arith.constant dense<0xFF800000> : vector<8xf32>
    %105 = vector.multi_reduction <maximumf>, %104, %cst_48 [1] : vector<8x8xf32> to vector<8xf32>
    %106 = vector.shape_cast %105 : vector<8xf32> to vector<8x1xf32>
    %107 = vector.broadcast %106 : vector<8x1xf32> to vector<8x8xf32>
    %108 = arith.subf %104, %107 : vector<8x8xf32>
    %109 = math.exp %108 : vector<8x8xf32>
    %cst_49 = arith.constant dense<0.000000e+00> : vector<8xf32>
    %110 = vector.multi_reduction <add>, %109, %cst_49 [1] : vector<8x8xf32> to vector<8xf32>
    %111 = vector.shape_cast %110 : vector<8xf32> to vector<8x1xf32>
    %cst_50 = arith.constant dense<0.000000e+00> : vector<8x8xf32>
    %112 = tpu.matmul %109, %103, %cst_50 {dimension_numbers = #tpu.dot_dimension_numbers<[1], [0], [0], [1], [0, 0, 1, 1], [], []>} : vector<8x8xf32>, vector<8x8xf32>, vector<8x8xf32> -> vector<8x8xf32>
    %cst_51 = arith.constant 0.176776692 : f32
    %113 = vector.broadcast %cst_51 : f32 to vector<8x1xf32>
    %114 = arith.divf %113, %111 : vector<8x1xf32>
    %115 = vector.broadcast %114 : vector<8x1xf32> to vector<8x8xf32>
    %116 = arith.mulf %112, %115 : vector<8x8xf32>
    %c8_52 = arith.constant 8 : index
    %c8_53 = arith.constant 8 : index
    %117 = vector.load %arg11[%c8_52, %c8_53] : memref<16x32xf32, #tpu.memory_space<vmem>>, vector<8x8xf32>
    tpu.vector_store %arg11[%c8_52, %c8_53], %116 {strides = array<i32>} : memref<16x32xf32, #tpu.memory_space<vmem>>, vector<8x8xf32>,
    %118 = vector.extract_strided_slice %5 {offsets = [8, 16], sizes = [8, 8], strides = [1, 1]} : vector<16x32xf32> to vector<8x8xf32>
    %119 = vector.extract_strided_slice %10 {offsets = [8, 16], sizes = [8, 8], strides = [1, 1]} : vector<16x32xf32> to vector<8x8xf32>
    %120 = vector.extract_strided_slice %15 {offsets = [8, 16], sizes = [8, 8], strides = [1, 1]} : vector<16x32xf32> to vector<8x8xf32>
    %cst_54 = arith.constant dense<0.000000e+00> : vector<8x8xf32>
    %121 = tpu.matmul %118, %119, %cst_54 {dimension_numbers = #tpu.dot_dimension_numbers<[1], [1], [0], [0], [0, 0, 1, 0], [], []>} : vector<8x8xf32>, vector<8x8xf32>, vector<8x8xf32> -> vector<8x8xf32>
    %cst_55 = arith.constant dense<0xFF800000> : vector<8xf32>
    %122 = vector.multi_reduction <maximumf>, %121, %cst_55 [1] : vector<8x8xf32> to vector<8xf32>
    %123 = vector.shape_cast %122 : vector<8xf32> to vector<8x1xf32>
    %124 = vector.broadcast %123 : vector<8x1xf32> to vector<8x8xf32>
    %125 = arith.subf %121, %124 : vector<8x8xf32>
    %126 = math.exp %125 : vector<8x8xf32>
    %cst_56 = arith.constant dense<0.000000e+00> : vector<8xf32>
    %127 = vector.multi_reduction <add>, %126, %cst_56 [1] : vector<8x8xf32> to vector<8xf32>
    %128 = vector.shape_cast %127 : vector<8xf32> to vector<8x1xf32>
    %cst_57 = arith.constant dense<0.000000e+00> : vector<8x8xf32>
    %129 = tpu.matmul %126, %120, %cst_57 {dimension_numbers = #tpu.dot_dimension_numbers<[1], [0], [0], [1], [0, 0, 1, 1], [], []>} : vector<8x8xf32>, vector<8x8xf32>, vector<8x8xf32> -> vector<8x8xf32>
    %cst_58 = arith.constant 0.176776692 : f32
    %130 = vector.broadcast %cst_58 : f32 to vector<8x1xf32>
    %131 = arith.divf %130, %128 : vector<8x1xf32>
    %132 = vector.broadcast %131 : vector<8x1xf32> to vector<8x8xf32>
    %133 = arith.mulf %129, %132 : vector<8x8xf32>
    %c8_59 = arith.constant 8 : index
    %c16_60 = arith.constant 16 : index
    %134 = vector.load %arg11[%c8_59, %c16_60] : memref<16x32xf32, #tpu.memory_space<vmem>>, vector<8x8xf32>
    tpu.vector_store %arg11[%c8_59, %c16_60], %133 {strides = array<i32>} : memref<16x32xf32, #tpu.memory_space<vmem>>, vector<8x8xf32>,
    %135 = vector.extract_strided_slice %5 {offsets = [8, 24], sizes = [8, 8], strides = [1, 1]} : vector<16x32xf32> to vector<8x8xf32>
    %136 = vector.extract_strided_slice %10 {offsets = [8, 24], sizes = [8, 8], strides = [1, 1]} : vector<16x32xf32> to vector<8x8xf32>
    %137 = vector.extract_strided_slice %15 {offsets = [8, 24], sizes = [8, 8], strides = [1, 1]} : vector<16x32xf32> to vector<8x8xf32>
    %cst_61 = arith.constant dense<0.000000e+00> : vector<8x8xf32>
    %138 = tpu.matmul %135, %136, %cst_61 {dimension_numbers = #tpu.dot_dimension_numbers<[1], [1], [0], [0], [0, 0, 1, 0], [], []>} : vector<8x8xf32>, vector<8x8xf32>, vector<8x8xf32> -> vector<8x8xf32>
    %cst_62 = arith.constant dense<0xFF800000> : vector<8xf32>
    %139 = vector.multi_reduction <maximumf>, %138, %cst_62 [1] : vector<8x8xf32> to vector<8xf32>
    %140 = vector.shape_cast %139 : vector<8xf32> to vector<8x1xf32>
    %141 = vector.broadcast %140 : vector<8x1xf32> to vector<8x8xf32>
    %142 = arith.subf %138, %141 : vector<8x8xf32>
    %143 = math.exp %142 : vector<8x8xf32>
    %cst_63 = arith.constant dense<0.000000e+00> : vector<8xf32>
    %144 = vector.multi_reduction <add>, %143, %cst_63 [1] : vector<8x8xf32> to vector<8xf32>
    %145 = vector.shape_cast %144 : vector<8xf32> to vector<8x1xf32>
    %cst_64 = arith.constant dense<0.000000e+00> : vector<8x8xf32>
    %146 = tpu.matmul %143, %137, %cst_64 {dimension_numbers = #tpu.dot_dimension_numbers<[1], [0], [0], [1], [0, 0, 1, 1], [], []>} : vector<8x8xf32>, vector<8x8xf32>, vector<8x8xf32> -> vector<8x8xf32>
    %cst_65 = arith.constant 0.176776692 : f32
    %147 = vector.broadcast %cst_65 : f32 to vector<8x1xf32>
    %148 = arith.divf %147, %145 : vector<8x1xf32>
    %149 = vector.broadcast %148 : vector<8x1xf32> to vector<8x8xf32>
    %150 = arith.mulf %146, %149 : vector<8x8xf32>
    %c8_66 = arith.constant 8 : index
    %c24_67 = arith.constant 24 : index
    %151 = vector.load %arg11[%c8_66, %c24_67] : memref<16x32xf32, #tpu.memory_space<vmem>>, vector<8x8xf32>
    tpu.vector_store %arg11[%c8_66, %c24_67], %150 {strides = array<i32>} : memref<16x32xf32, #tpu.memory_space<vmem>>, vector<8x8xf32>,
    %c0_68 = arith.constant 0 : index
    %c0_69 = arith.constant 0 : index
    %152 = vector.load %arg11[%c0_68, %c0_69] : memref<16x32xf32, #tpu.memory_space<vmem>>, vector<16x32xf32>
    %c0_70 = arith.constant 0 : index
    %c0_71 = arith.constant 0 : index
    %153 = vector.load %arg8[%c0_70, %c0_71] : memref<32x32xf32, #tpu.memory_space<vmem>>, vector<32x32xf32>
    %cst_72 = arith.constant dense<0.000000e+00> : vector<16x32xf32>
    %154 = tpu.matmul %152, %153, %cst_72 {dimension_numbers = #tpu.dot_dimension_numbers<[1], [0], [0], [1], [0, 0, 1, 1], [], []>} : vector<16x32xf32>, vector<32x32xf32>, vector<16x32xf32> -> vector<16x32xf32>
    %c0_73 = arith.constant 0 : index
    %c0_74 = arith.constant 0 : index
    %155 = vector.load %arg9[%c0_73, %c0_74] : memref<1x32xf32, #tpu.memory_space<vmem>>, vector<1x32xf32>
    %156 = vector.broadcast %155 : vector<1x32xf32> to vector<16x32xf32>
    %157 = arith.addf %154, %156 : vector<16x32xf32>
    %c0_75 = arith.constant 0 : index
    %c0_76 = arith.constant 0 : index
    %158 = vector.load %arg10[%c0_75, %c0_76] : memref<16x32xf32, #tpu.memory_space<vmem>>, vector<16x32xf32>
    tpu.vector_store %arg10[%c0_75, %c0_76], %157 {strides = array<i32>} : memref<16x32xf32, #tpu.memory_space<vmem>>, vector<16x32xf32>,
    return
  }
  func.func @transform_0(%arg0: i32) -> (i32, i32) {
    %c0_i32 = arith.constant 0 : i32
    %c0_i32_0 = arith.constant 0 : i32
    return %arg0, %c0_i32 : i32, i32
  }
  func.func @transform_1(%arg0: i32) -> (i32, i32) {
    %c0_i32 = arith.constant 0 : i32
    %c0_i32_0 = arith.constant 0 : i32
    %c0_i32_1 = arith.constant 0 : i32
    return %c0_i32, %c0_i32_0 : i32, i32
  }
  func.func @transform_2(%arg0: i32) -> (i32, i32) {
    %c0_i32 = arith.constant 0 : i32
    %c0_i32_0 = arith.constant 0 : i32
    %c0_i32_1 = arith.constant 0 : i32
    return %c0_i32, %c0_i32_0 : i32, i32
  }
  func.func @transform_3(%arg0: i32) -> (i32, i32) {
    %c0_i32 = arith.constant 0 : i32
    %c0_i32_0 = arith.constant 0 : i32
    %c0_i32_1 = arith.constant 0 : i32
    return %c0_i32, %c0_i32_0 : i32, i32
  }
  func.func @transform_4(%arg0: i32) -> (i32, i32) {
    %c0_i32 = arith.constant 0 : i32
    %c0_i32_0 = arith.constant 0 : i32
    %c0_i32_1 = arith.constant 0 : i32
    return %c0_i32, %c0_i32_0 : i32, i32
  }
  func.func @transform_5(%arg0: i32) -> (i32, i32) {
    %c0_i32 = arith.constant 0 : i32
    %c0_i32_0 = arith.constant 0 : i32
    %c0_i32_1 = arith.constant 0 : i32
    return %c0_i32, %c0_i32_0 : i32, i32
  }
  func.func @transform_6(%arg0: i32) -> (i32, i32) {
    %c0_i32 = arith.constant 0 : i32
    %c0_i32_0 = arith.constant 0 : i32
    %c0_i32_1 = arith.constant 0 : i32
    return %c0_i32, %c0_i32_0 : i32, i32
  }
  func.func @transform_7(%arg0: i32) -> (i32, i32) {
    %c0_i32 = arith.constant 0 : i32
    %c0_i32_0 = arith.constant 0 : i32
    %c0_i32_1 = arith.constant 0 : i32
    return %c0_i32, %c0_i32_0 : i32, i32
  }
  func.func @transform_8(%arg0: i32) -> (i32, i32) {
    %c0_i32 = arith.constant 0 : i32
    %c0_i32_0 = arith.constant 0 : i32
    %c0_i32_1 = arith.constant 0 : i32
    return %c0_i32, %c0_i32_0 : i32, i32
  }
  func.func @transform_9(%arg0: i32) -> (i32, i32) {
    %c0_i32 = arith.constant 0 : i32
    %c0_i32_0 = arith.constant 0 : i32
    return %arg0, %c0_i32 : i32, i32
  }
}

</mosaic_0001>

<llo_original>
// kernel: tpu_custom_call.1
$region0: #{tpu_custom_call.1}
  #allocation0 [shape = 'u32[]', space=smem, size = 0x4, offset = 0x4, fixed_abs, tag = 'smem constant byte address 0x4 - core index']
  #allocation1 [shape = 'u32[144,128]{1,0:T(1,128)}', space=vmem, size = 0x12000, scoped, tag = 'internal scratch']
  #allocation2 [shape = 'f32[16,32]{1,0:T(8,128)}', space=vmem, size = 0x2000, scoped, tag = 'scratch operand']
  %s0 = inlined_call_operand.hbm [shape: f32[16,32], index: 0, kind: input, shape index: {}]
  %s1 = inlined_call_operand.hbm [shape: f32[32,32], index: 1, kind: input, shape index: {}]
  %s2 = inlined_call_operand.vmem [shape: f32[1,32], index: 2, kind: input, shape index: {}]
  %s3 = inlined_call_operand.hbm [shape: f32[32,32], index: 3, kind: input, shape index: {}]
  %s4 = inlined_call_operand.vmem [shape: f32[1,32], index: 4, kind: input, shape index: {}]
  %s5 = inlined_call_operand.hbm [shape: f32[32,32], index: 5, kind: input, shape index: {}]
  %s6 = inlined_call_operand.vmem [shape: f32[1,32], index: 6, kind: input, shape index: {}]
  %s7 = inlined_call_operand.hbm [shape: f32[32,32], index: 7, kind: input, shape index: {}]
  %s8 = inlined_call_operand.vmem [shape: f32[1,32], index: 8, kind: input, shape index: {}]
  %s9 = inlined_call_operand.hbm [shape: f32[16,32], index: 9, kind: output, shape index: {}]
  %s10 = sld [smem:[#allocation0]]
  $region66: #{tpu_custom_call.1} parent=0
    _
  %s12 = ssub.s32 1, %s10
  %s13 = scalar_select 0, %s12, %s10
  $region1: #{tpu_custom_call.1} parent=0
    #allocation3 [shape = 'u8[8192]{0}', space=vmem, size = 0x2000, scoped, tag = 'input window, operand 0, single buffered']
    #allocation4 [shape = 's32[1]{0}', space=sflag, size = 0x4, scoped, tag = 'scoped memory for tpu_custom_call.1']
    #allocation5 [shape = 's32[1]{0}', space=sflag, size = 0x4, scoped, tag = 'scoped memory for tpu_custom_call.1']
    #allocation6 [shape = 'u8[16384]{0}', space=vmem, size = 0x4000, scoped, tag = 'input window, operand 1, single buffered']
    #allocation7 [shape = 's32[1]{0}', space=sflag, size = 0x4, scoped, tag = 'scoped memory for tpu_custom_call.1']
    #allocation8 [shape = 'u8[16384]{0}', space=vmem, size = 0x4000, scoped, tag = 'input window, operand 3, single buffered']
    #allocation9 [shape = 'u8[16384]{0}', space=vmem, size = 0x4000, scoped, tag = 'input window, operand 5, single buffered']
    #allocation10 [shape = 's32[1]{0}', space=sflag, size = 0x4, scoped, tag = 'scoped memory for tpu_custom_call.1']
    #allocation11 [shape = 'u8[16384]{0}', space=vmem, size = 0x4000, scoped, tag = 'input window, operand 7, single buffered']
    #allocation12 [shape = 'u8[8192]{0}', space=vmem, size = 0x2000, scoped, tag = 'output window, operand 0, single buffered']
    %14 = vsyncpa [#allocation4], 0
    %15 = vsyncpa [#allocation7], 0
    %16 = vsyncpa [#allocation10], 0
    %17 = vsyncpa [#allocation5], 0
    // Predicated region
    $region2: #{tpu_custom_call.1} parent=1 // pred_check
      _
    $region3: #{tpu_custom_call.1} parent=1 // pred_check_branch
      %19 = sbr.rel (0) target = $region5
    $region4: #{tpu_custom_call.1} parent=1 // pred_region
      %s21 = ssub.s32 256, 256
      %22 = vsyncadd [#allocation4], %s21
      %s23 = sshll.u32 [#allocation3], 4
      %s24 = int_to_ptr.vmem [resolvable:$true] %s23
      %29 = dma.hbm_to_vmem [thread:$0]  %s0, 256, %s24, [#allocation4], 128, 128, 8
    $region5: #{tpu_custom_call.1} parent=1 // pred_fallthru
      _
    // Predicated region
    $region6: #{tpu_custom_call.1} parent=1 // pred_check
      _
    $region7: #{tpu_custom_call.1} parent=1 // pred_check_branch
      %31 = sbr.rel (0) target = $region9
    $region8: #{tpu_custom_call.1} parent=1 // pred_region
      %s33 = ssub.s32 512, 512
      %34 = vsyncadd [#allocation7], %s33
      %s35 = sshll.u32 [#allocation6], 4
      %s36 = int_to_ptr.vmem [resolvable:$true] %s35
      %41 = dma.hbm_to_vmem [thread:$0]  %s1, 512, %s36, [#allocation7], 128, 128, 8
    $region9: #{tpu_custom_call.1} parent=1 // pred_fallthru
      _
    // Predicated region
    $region10: #{tpu_custom_call.1} parent=1 // pred_check
      _
    $region11: #{tpu_custom_call.1} parent=1 // pred_check_branch
      %43 = sbr.rel (0) target = $region13
    $region12: #{tpu_custom_call.1} parent=1 // pred_region
      _
    $region13: #{tpu_custom_call.1} parent=1 // pred_fallthru
      _
    // Predicated region
    $region14: #{tpu_custom_call.1} parent=1 // pred_check
      _
    $region15: #{tpu_custom_call.1} parent=1 // pred_check_branch
      %45 = sbr.rel (0) target = $region17
    $region16: #{tpu_custom_call.1} parent=1 // pred_region
      %s47 = ssub.s32 512, 512
      %48 = vsyncadd [#allocation7], %s47
      %s49 = sshll.u32 [#allocation8], 4
      %s50 = int_to_ptr.vmem [resolvable:$true] %s49
      %55 = dma.hbm_to_vmem [thread:$0]  %s3, 512, %s50, [#allocation7], 128, 128, 8
    $region17: #{tpu_custom_call.1} parent=1 // pred_fallthru
      _
    // Predicated region
    $region18: #{tpu_custom_call.1} parent=1 // pred_check
      _
    $region19: #{tpu_custom_call.1} parent=1 // pred_check_branch
      %57 = sbr.rel (0) target = $region21
    $region20: #{tpu_custom_call.1} parent=1 // pred_region
      _
    $region21: #{tpu_custom_call.1} parent=1 // pred_fallthru
      _
    // Predicated region
    $region22: #{tpu_custom_call.1} parent=1 // pred_check
      _
    $region23: #{tpu_custom_call.1} parent=1 // pred_check_branch
      %59 = sbr.rel (0) target = $region25
    $region24: #{tpu_custom_call.1} parent=1 // pred_region
      %s61 = ssub.s32 512, 512
      %62 = vsyncadd [#allocation10], %s61
      %s63 = sshll.u32 [#allocation9], 4
      %s64 = int_to_ptr.vmem [resolvable:$true] %s63
      %69 = dma.hbm_to_vmem [thread:$0]  %s5, 512, %s64, [#allocation10], 128, 128, 8
    $region25: #{tpu_custom_call.1} parent=1 // pred_fallthru
      _
    // Predicated region
    $region26: #{tpu_custom_call.1} parent=1 // pred_check
      _
    $region27: #{tpu_custom_call.1} parent=1 // pred_check_branch
      %71 = sbr.rel (0) target = $region29
    $region28: #{tpu_custom_call.1} parent=1 // pred_region
      _
    $region29: #{tpu_custom_call.1} parent=1 // pred_fallthru
      _
    // Predicated region
    $region30: #{tpu_custom_call.1} parent=1 // pred_check
      _
    $region31: #{tpu_custom_call.1} parent=1 // pred_check_branch
      %73 = sbr.rel (0) target = $region33
    $region32: #{tpu_custom_call.1} parent=1 // pred_region
      %s75 = ssub.s32 512, 512
      %76 = vsyncadd [#allocation10], %s75
      %s77 = sshll.u32 [#allocation11], 4
      %s78 = int_to_ptr.vmem [resolvable:$true] %s77
      %83 = dma.hbm_to_vmem [thread:$0]  %s7, 512, %s78, [#allocation10], 128, 128, 8
    $region33: #{tpu_custom_call.1} parent=1 // pred_fallthru
      _
    // Predicated region
    $region34: #{tpu_custom_call.1} parent=1 // pred_check
      _
    $region35: #{tpu_custom_call.1} parent=1 // pred_check_branch
      %85 = sbr.rel (0) target = $region37
    $region36: #{tpu_custom_call.1} parent=1 // pred_region
      _
    $region37: #{tpu_custom_call.1} parent=1 // pred_fallthru
      _
    // Predicated region
    $region38: #{tpu_custom_call.1} parent=1 // pred_check
      _
    $region39: #{tpu_custom_call.1} parent=1 // pred_check_branch
      %87 = sbr.rel (0) target = $region41
    $region40: #{tpu_custom_call.1} parent=1 // pred_region
      %88 = dma.done [#allocation4], 256
    $region41: #{tpu_custom_call.1} parent=1 // pred_fallthru
      _
    // Predicated region
    $region42: #{tpu_custom_call.1} parent=1 // pred_check
      _
    $region43: #{tpu_custom_call.1} parent=1 // pred_check_branch
      %90 = sbr.rel (0) target = $region45
    $region44: #{tpu_custom_call.1} parent=1 // pred_region
      %91 = dma.done [#allocation7], 512
    $region45: #{tpu_custom_call.1} parent=1 // pred_fallthru
      _
    // Predicated region
    $region46: #{tpu_custom_call.1} parent=1 // pred_check
      _
    $region47: #{tpu_custom_call.1} parent=1 // pred_check_branch
      %93 = sbr.rel (0) target = $region49
    $region48: #{tpu_custom_call.1} parent=1 // pred_region
      %94 = dma.done [#allocation7], 512
    $region49: #{tpu_custom_call.1} parent=1 // pred_fallthru
      _
    // Predicated region
    $region50: #{tpu_custom_call.1} parent=1 // pred_check
      _
    $region51: #{tpu_custom_call.1} parent=1 // pred_check_branch
      %96 = sbr.rel (0) target = $region53
    $region52: #{tpu_custom_call.1} parent=1 // pred_region
      %97 = dma.done [#allocation10], 512
    $region53: #{tpu_custom_call.1} parent=1 // pred_fallthru
      _
    // Predicated region
    $region54: #{tpu_custom_call.1} parent=1 // pred_check
      _
    $region55: #{tpu_custom_call.1} parent=1 // pred_check_branch
      %99 = sbr.rel (0) target = $region57
    $region56: #{tpu_custom_call.1} parent=1 // pred_region
      %100 = dma.done [#allocation10], 512
    $region57: #{tpu_custom_call.1} parent=1 // pred_fallthru
      _
    %v101 = vld [vmem:[#allocation3] sm:$0xff]
    %v102 = vld [vmem:[#allocation3 + $0x8] sm:$0xff]
    %v103 = vld [vmem:[#allocation6] sm:$0xff]
    %v104 = vld [vmem:[#allocation6 + $0x8] sm:$0xff]
    %v105 = vld [vmem:[#allocation6 + $0x10] sm:$0xff]
    %v106 = vld [vmem:[#allocation6 + $0x18] sm:$0xff]
    %v107 = vld [vmem:[%s2] sm:$0x1]
    %v109 = vlaneseq
    %v110 = vshrl.u32 %v109, 7
    %v111 = vsub.s32 0, %v110
    %v112 = vrot.slane %v107, %v111
    %vm114 = vcmask 261120
    %v116 = vsel %vm114, %v101, 0
    %v119 = vsel %vm114, %v102, 0
    %121 = vmatprep.subr.mxu0 0.0
    %122 = vmatpush1.msra.mxu0 %v103
    %123 = vmatprep.subr.mxu0 0.0
    %124 = vmatpush1.msra.mxu0 %v104
    %125 = vmatprep.subr.mxu0 0.0
    %126 = vmatpush1.msra.mxu0 %v105
    %127 = vmatprep.subr.mxu0 0.0
    %128 = vmatpush1.msra.mxu0 %v106
    %129 = vmatprep.subr.mxu0 0.0
    %130 = vmatpush1.msra.mxu0 0.0
    %131 = vmatprep.subr.mxu0 0.0
    %132 = vmatpush1.msra.mxu0 0.0
    %133 = vmatprep.subr.mxu0 0.0
    %134 = vmatpush1.msra.mxu0 0.0
    %135 = vmatprep.subr.mxu0 0.0
    %136 = vmatpush1.msra.mxu0 0.0
    %137 = vmatprep.subr.mxu0 0.0
    %138 = vmatpush1.msra.mxu0 0.0
    %139 = vmatprep.subr.mxu0 0.0
    %140 = vmatpush1.msra.mxu0 0.0
    %141 = vmatprep.subr.mxu0 0.0
    %142 = vmatpush1.msra.mxu0 0.0
    %143 = vmatprep.subr.mxu0 0.0
    %144 = vmatpush1.msra.mxu0 0.0
    %145 = vmatprep.subr.mxu0 0.0
    %146 = vmatpush1.msra.mxu0 0.0
    %147 = vmatprep.subr.mxu0 0.0
    %148 = vmatpush1.msra.mxu0 0.0
    %149 = vmatprep.subr.mxu0 0.0
    %150 = vmatpush1.msra.mxu0 0.0
    %151 = vmatprep.subr.mxu0 0.0
    %152 = vmatpush1.msra.mxu0 0.0
    %153 = vmatprep.subr.mxu0 0.0
    %154 = vmatpush1.msra.mxu0 0.0
    %155 = vmatprep.subr.mxu0 0.0
    %156 = vmatpush1.msra.mxu0 0.0
    %157 = vmatprep.subr.mxu0 0.0
    %158 = vmatpush1.msra.mxu0 0.0
    %159 = vmatprep.subr.mxu0 0.0
    %160 = vmatpush1.msra.mxu0 0.0
    %161 = vmatprep.subr.mxu0 0.0
    %162 = vmatpush1.msra.mxu0 0.0
    %163 = vmatprep.subr.mxu0 0.0
    %164 = vmatpush1.msra.mxu0 0.0
    %165 = vmatprep.subr.mxu0 0.0
    %166 = vmatpush1.msra.mxu0 0.0
    %167 = vmatprep.subr.mxu0 0.0
    %168 = vmatpush1.msra.mxu0 0.0
    %169 = vmatprep.subr.mxu0 0.0
    %170 = vmatpush1.msra.mxu0 0.0
    %171 = vmatprep.subr.mxu0 0.0
    %172 = vmatpush1.msra.mxu0 0.0
    %173 = vmatprep.subr.mxu0 0.0
    %174 = vmatpush1.msra.mxu0 0.0
    %175 = vmatprep.subr.mxu0 0.0
    %176 = vmatpush1.msra.mxu0 0.0
    %177 = vmatprep.subr.mxu0 0.0
    %178 = vmatpush1.msra.mxu0 0.0
    %179 = vmatprep.subr.mxu0 0.0
    %180 = vmatpush1.msra.mxu0 0.0
    %181 = vmatprep.subr.mxu0 0.0
    %182 = vmatpush1.msra.mxu0 0.0
    %183 = vmatprep.subr.mxu0 0.0
    %184 = vmatpush1.msra.mxu0 0.0
    %185 = vmatprep.mubr.f32.mxu0 0.0
    %186 = vmatmul.mubr.f32.gmra.mrb[0].mxu0 %v116
    %v187 = vpop.f32.mrb[0].mxu0
    %v188 = vadd.f32 %v112, %v187
    %v189 = vpop.f32.mrb[0].mxu0
    %190 = vmatprep.mubr.f32.mxu0 0.0
    %191 = vmatmul.mubr.f32.gmra.mrb[0].mxu0 %v119
    %v192 = vpop.f32.mrb[0].mxu0
    %v193 = vadd.f32 %v112, %v192
    %v194 = vpop.f32.mrb[0].mxu0
    %195 = vdwg.mxu0
    %v196 = vld [vmem:[#allocation8] sm:$0xff]
    %v197 = vld [vmem:[#allocation8 + $0x8] sm:$0xff]
    %v198 = vld [vmem:[#allocation8 + $0x10] sm:$0xff]
    %v199 = vld [vmem:[#allocation8 + $0x18] sm:$0xff]
    %v200 = vld [vmem:[%s4] sm:$0x1]
    %v202 = vlaneseq
    %v203 = vshrl.u32 %v202, 7
    %v204 = vsub.s32 0, %v203
    %v205 = vrot.slane %v200, %v204
    %207 = vmatprep.subr.mxu0 0.0
    %208 = vmatpush1.msra.mxu0 %v196
    %209 = vmatprep.subr.mxu0 0.0
    %210 = vmatpush1.msra.mxu0 %v197
    %211 = vmatprep.subr.mxu0 0.0
    %212 = vmatpush1.msra.mxu0 %v198
    %213 = vmatprep.subr.mxu0 0.0
    %214 = vmatpush1.msra.mxu0 %v199
    %215 = vmatprep.subr.mxu0 0.0
    %216 = vmatpush1.msra.mxu0 0.0
    %217 = vmatprep.subr.mxu0 0.0
    %218 = vmatpush1.msra.mxu0 0.0
    %219 = vmatprep.subr.mxu0 0.0
    %220 = vmatpush1.msra.mxu0 0.0
    %221 = vmatprep.subr.mxu0 0.0
    %222 = vmatpush1.msra.mxu0 0.0
    %223 = vmatprep.subr.mxu0 0.0
    %224 = vmatpush1.msra.mxu0 0.0
    %225 = vmatprep.subr.mxu0 0.0
    %226 = vmatpush1.msra.mxu0 0.0
    %227 = vmatprep.subr.mxu0 0.0
    %228 = vmatpush1.msra.mxu0 0.0
    %229 = vmatprep.subr.mxu0 0.0
    %230 = vmatpush1.msra.mxu0 0.0
    %231 = vmatprep.subr.mxu0 0.0
    %232 = vmatpush1.msra.mxu0 0.0
    %233 = vmatprep.subr.mxu0 0.0
    %234 = vmatpush1.msra.mxu0 0.0
    %235 = vmatprep.subr.mxu0 0.0
    %236 = vmatpush1.msra.mxu0 0.0
    %237 = vmatprep.subr.mxu0 0.0
    %238 = vmatpush1.msra.mxu0 0.0
    %239 = vmatprep.subr.mxu0 0.0
    %240 = vmatpush1.msra.mxu0 0.0
    %241 = vmatprep.subr.mxu0 0.0
    %242 = vmatpush1.msra.mxu0 0.0
    %243 = vmatprep.subr.mxu0 0.0
    %244 = vmatpush1.msra.mxu0 0.0
    %245 = vmatprep.subr.mxu0 0.0
    %246 = vmatpush1.msra.mxu0 0.0
    %247 = vmatprep.subr.mxu0 0.0
    %248 = vmatpush1.msra.mxu0 0.0
    %249 = vmatprep.subr.mxu0 0.0
    %250 = vmatpush1.msra.mxu0 0.0
    %251 = vmatprep.subr.mxu0 0.0
    %252 = vmatpush1.msra.mxu0 0.0
    %253 = vmatprep.subr.mxu0 0.0
    %254 = vmatpush1.msra.mxu0 0.0
    %255 = vmatprep.subr.mxu0 0.0
    %256 = vmatpush1.msra.mxu0 0.0
    %257 = vmatprep.subr.mxu0 0.0
    %258 = vmatpush1.msra.mxu0 0.0
    %259 = vmatprep.subr.mxu0 0.0
    %260 = vmatpush1.msra.mxu0 0.0
    %261 = vmatprep.subr.mxu0 0.0
    %262 = vmatpush1.msra.mxu0 0.0
    %263 = vmatprep.subr.mxu0 0.0
    %264 = vmatpush1.msra.mxu0 0.0
    %265 = vmatprep.subr.mxu0 0.0
    %266 = vmatpush1.msra.mxu0 0.0
    %267 = vmatprep.subr.mxu0 0.0
    %268 = vmatpush1.msra.mxu0 0.0
    %269 = vmatprep.subr.mxu0 0.0
    %270 = vmatpush1.msra.mxu0 0.0
    %271 = vmatprep.mubr.f32.mxu0 0.0
    %272 = vmatmul.mubr.f32.gmra.mrb[0].mxu0 %v116
    %v273 = vpop.f32.mrb[0].mxu0
    %v274 = vadd.f32 %v205, %v273
    %v275 = vpop.f32.mrb[0].mxu0
    %276 = vmatprep.mubr.f32.mxu0 0.0
    %277 = vmatmul.mubr.f32.gmra.mrb[0].mxu0 %v119
    %v278 = vpop.f32.mrb[0].mxu0
    %v279 = vadd.f32 %v205, %v278
    %v280 = vpop.f32.mrb[0].mxu0
    %281 = vdwg.mxu0
    %v282 = vld [vmem:[#allocation9] sm:$0xff]
    %v283 = vld [vmem:[#allocation9 + $0x8] sm:$0xff]
    %v284 = vld [vmem:[#allocation9 + $0x10] sm:$0xff]
    %v285 = vld [vmem:[#allocation9 + $0x18] sm:$0xff]
    %v286 = vld [vmem:[%s6] sm:$0x1]
    %v288 = vlaneseq
    %v289 = vshrl.u32 %v288, 7
    %v290 = vsub.s32 0, %v289
    %v291 = vrot.slane %v286, %v290
    %293 = vmatprep.subr.mxu0 0.0
    %294 = vmatpush1.msra.mxu0 %v282
    %295 = vmatprep.subr.mxu0 0.0
    %296 = vmatpush1.msra.mxu0 %v283
    %297 = vmatprep.subr.mxu0 0.0
    %298 = vmatpush1.msra.mxu0 %v284
    %299 = vmatprep.subr.mxu0 0.0
    %300 = vmatpush1.msra.mxu0 %v285
    %301 = vmatprep.subr.mxu0 0.0
    %302 = vmatpush1.msra.mxu0 0.0
    %303 = vmatprep.subr.mxu0 0.0
    %304 = vmatpush1.msra.mxu0 0.0
    %305 = vmatprep.subr.mxu0 0.0
    %306 = vmatpush1.msra.mxu0 0.0
    %307 = vmatprep.subr.mxu0 0.0
    %308 = vmatpush1.msra.mxu0 0.0
    %309 = vmatprep.subr.mxu0 0.0
    %310 = vmatpush1.msra.mxu0 0.0
    %311 = vmatprep.subr.mxu0 0.0
    %312 = vmatpush1.msra.mxu0 0.0
    %313 = vmatprep.subr.mxu0 0.0
    %314 = vmatpush1.msra.mxu0 0.0
    %315 = vmatprep.subr.mxu0 0.0
    %316 = vmatpush1.msra.mxu0 0.0
    %317 = vmatprep.subr.mxu0 0.0
    %318 = vmatpush1.msra.mxu0 0.0
    %319 = vmatprep.subr.mxu0 0.0
    %320 = vmatpush1.msra.mxu0 0.0
    %321 = vmatprep.subr.mxu0 0.0
    %322 = vmatpush1.msra.mxu0 0.0
    %323 = vmatprep.subr.mxu0 0.0
    %324 = vmatpush1.msra.mxu0 0.0
    %325 = vmatprep.subr.mxu0 0.0
    %326 = vmatpush1.msra.mxu0 0.0
    %327 = vmatprep.subr.mxu0 0.0
    %328 = vmatpush1.msra.mxu0 0.0
    %329 = vmatprep.subr.mxu0 0.0
    %330 = vmatpush1.msra.mxu0 0.0
    %331 = vmatprep.subr.mxu0 0.0
    %332 = vmatpush1.msra.mxu0 0.0
    %333 = vmatprep.subr.mxu0 0.0
    %334 = vmatpush1.msra.mxu0 0.0
    %335 = vmatprep.subr.mxu0 0.0
    %336 = vmatpush1.msra.mxu0 0.0
    %337 = vmatprep.subr.mxu0 0.0
    %338 = vmatpush1.msra.mxu0 0.0
    %339 = vmatprep.subr.mxu0 0.0
    %340 = vmatpush1.msra.mxu0 0.0
    %341 = vmatprep.subr.mxu0 0.0
    %342 = vmatpush1.msra.mxu0 0.0
    %343 = vmatprep.subr.mxu0 0.0
    %344 = vmatpush1.msra.mxu0 0.0
    %345 = vmatprep.subr.mxu0 0.0
    %346 = vmatpush1.msra.mxu0 0.0
    %347 = vmatprep.subr.mxu0 0.0
    %348 = vmatpush1.msra.mxu0 0.0
    %349 = vmatprep.subr.mxu0 0.0
    %350 = vmatpush1.msra.mxu0 0.0
    %351 = vmatprep.subr.mxu0 0.0
    %352 = vmatpush1.msra.mxu0 0.0
    %353 = vmatprep.subr.mxu0 0.0
    %354 = vmatpush1.msra.mxu0 0.0
    %355 = vmatprep.subr.mxu0 0.0
    %356 = vmatpush1.msra.mxu0 0.0
    %357 = vmatprep.mubr.f32.mxu0 0.0
    %358 = vmatmul.mubr.f32.gmra.mrb[0].mxu0 %v116
    %v359 = vpop.f32.mrb[0].mxu0
    %v360 = vadd.f32 %v291, %v359
    %v361 = vpop.f32.mrb[0].mxu0
    %362 = vmatprep.mubr.f32.mxu0 0.0
    %363 = vmatmul.mubr.f32.gmra.mrb[0].mxu0 %v119
    %v364 = vpop.f32.mrb[0].mxu0
    %v365 = vadd.f32 %v291, %v364
    %v366 = vpop.f32.mrb[0].mxu0
    %367 = vdwg.mxu0
    %vm368 = vcmask 64512
    %v370 = vsel %vm368, %v188, 0
    %v373 = vsel %vm368, %v274, 0
    %375 = vmatprep.subr.mxu0 0.0
    %376 = vmatpush1.xpose.msra.mxu0 %v373
    %377 = vmatprep.subr.mxu0 0.0
    %378 = vmatpush1.xpose.msra.mxu0 0.0
    %379 = vmatprep.subr.mxu0 0.0
    %380 = vmatpush1.xpose.msra.mxu0 0.0
    %381 = vmatprep.subr.mxu0 0.0
    %382 = vmatpush1.xpose.msra.mxu0 0.0
    %383 = vmatprep.subr.mxu0 0.0
    %384 = vmatpush1.xpose.msra.mxu0 0.0
    %385 = vmatprep.subr.mxu0 0.0
    %386 = vmatpush1.xpose.msra.mxu0 0.0
    %387 = vmatprep.subr.mxu0 0.0
    %388 = vmatpush1.xpose.msra.mxu0 0.0
    %389 = vmatprep.subr.mxu0 0.0
    %390 = vmatpush1.xpose.msra.mxu0 0.0
    %391 = vmatprep.subr.mxu0 0.0
    %392 = vmatpush1.xpose.msra.mxu0 0.0
    %393 = vmatprep.subr.mxu0 0.0
    %394 = vmatpush1.xpose.msra.mxu0 0.0
    %395 = vmatprep.subr.mxu0 0.0
    %396 = vmatpush1.xpose.msra.mxu0 0.0
    %397 = vmatprep.subr.mxu0 0.0
    %398 = vmatpush1.xpose.msra.mxu0 0.0
    %399 = vmatprep.subr.mxu0 0.0
    %400 = vmatpush1.xpose.msra.mxu0 0.0
    %401 = vmatprep.subr.mxu0 0.0
    %402 = vmatpush1.xpose.msra.mxu0 0.0
    %403 = vmatprep.subr.mxu0 0.0
    %404 = vmatpush1.xpose.msra.mxu0 0.0
    %405 = vmatprep.subr.mxu0 0.0
    %406 = vmatpush1.xpose.msra.mxu0 0.0
    %407 = vmatprep.subr.mxu0 0.0
    %408 = vmatpush1.xpose.msra.mxu0 0.0
    %409 = vmatprep.subr.mxu0 0.0
    %410 = vmatpush1.xpose.msra.mxu0 0.0
    %411 = vmatprep.subr.mxu0 0.0
    %412 = vmatpush1.xpose.msra.mxu0 0.0
    %413 = vmatprep.subr.mxu0 0.0
    %414 = vmatpush1.xpose.msra.mxu0 0.0
    %415 = vmatprep.subr.mxu0 0.0
    %416 = vmatpush1.xpose.msra.mxu0 0.0
    %417 = vmatprep.subr.mxu0 0.0
    %418 = vmatpush1.xpose.msra.mxu0 0.0
    %419 = vmatprep.subr.mxu0 0.0
    %420 = vmatpush1.xpose.msra.mxu0 0.0
    %421 = vmatprep.subr.mxu0 0.0
    %422 = vmatpush1.xpose.msra.mxu0 0.0
    %423 = vmatprep.subr.mxu0 0.0
    %424 = vmatpush1.xpose.msra.mxu0 0.0
    %425 = vmatprep.subr.mxu0 0.0
    %426 = vmatpush1.xpose.msra.mxu0 0.0
    %427 = vmatprep.subr.mxu0 0.0
    %428 = vmatpush1.xpose.msra.mxu0 0.0
    %429 = vmatprep.subr.mxu0 0.0
    %430 = vmatpush1.xpose.msra.mxu0 0.0
    %431 = vmatprep.subr.mxu0 0.0
    %432 = vmatpush1.xpose.msra.mxu0 0.0
    %433 = vmatprep.subr.mxu0 0.0
    %434 = vmatpush1.xpose.msra.mxu0 0.0
    %435 = vmatprep.subr.mxu0 0.0
    %436 = vmatpush1.xpose.msra.mxu0 0.0
    %437 = vmatprep.subr.mxu0 0.0
    %438 = vmatpush1.xpose.msra.mxu0 0.0
    %439 = vmatprep.mubr.f32.mxu0 0.0
    %440 = vmatmul.mubr.f32.gmra.mrb[0].mxu0 %v370
    %v441 = vpop.f32.mrb[0].mxu0
    %v442 = vadd.f32 0.0, %v441
    %v443 = vpop.f32.mrb[0].mxu0
    %444 = vdwg.mxu0
    %v445 = vsel %vm368, %v442, -inf
    %446 = vmax.xlane.f32.xlu0 %v445
    %v447 = vpop.xlane.xlu0 %446
    %v448 = vsub.f32 %v442, %v447
    %v449 = vmul.f32 %v448, 1.442695
    %v450 = vpow.pop %v449
    %v451 = vsel %vm368, %v450, 0.0
    %452 = vadd.xlane.f32.xlu0 %v451
    %v453 = vpop.xlane.xlu0 %452
    %v455 = vsel %vm368, %v450, 0
    %457 = vmatprep.subr.mxu0 0.0
    %458 = vmatpush1.msra.mxu0 %v360
    %459 = vmatprep.subr.mxu0 0.0
    %460 = vmatpush1.msra.mxu0 0.0
    %461 = vmatprep.subr.mxu0 0.0
    %462 = vmatpush1.msra.mxu0 0.0
    %463 = vmatprep.subr.mxu0 0.0
    %464 = vmatpush1.msra.mxu0 0.0
    %465 = vmatprep.subr.mxu0 0.0
    %466 = vmatpush1.msra.mxu0 0.0
    %467 = vmatprep.subr.mxu0 0.0
    %468 = vmatpush1.msra.mxu0 0.0
    %469 = vmatprep.subr.mxu0 0.0
    %470 = vmatpush1.msra.mxu0 0.0
    %471 = vmatprep.subr.mxu0 0.0
    %472 = vmatpush1.msra.mxu0 0.0
    %473 = vmatprep.subr.mxu0 0.0
    %474 = vmatpush1.msra.mxu0 0.0
    %475 = vmatprep.subr.mxu0 0.0
    %476 = vmatpush1.msra.mxu0 0.0
    %477 = vmatprep.subr.mxu0 0.0
    %478 = vmatpush1.msra.mxu0 0.0
    %479 = vmatprep.subr.mxu0 0.0
    %480 = vmatpush1.msra.mxu0 0.0
    %481 = vmatprep.subr.mxu0 0.0
    %482 = vmatpush1.msra.mxu0 0.0
    %483 = vmatprep.subr.mxu0 0.0
    %484 = vmatpush1.msra.mxu0 0.0
    %485 = vmatprep.subr.mxu0 0.0
    %486 = vmatpush1.msra.mxu0 0.0
    %487 = vmatprep.subr.mxu0 0.0
    %488 = vmatpush1.msra.mxu0 0.0
    %489 = vmatprep.subr.mxu0 0.0
    %490 = vmatpush1.msra.mxu0 0.0
    %491 = vmatprep.subr.mxu0 0.0
    %492 = vmatpush1.msra.mxu0 0.0
    %493 = vmatprep.subr.mxu0 0.0
    %494 = vmatpush1.msra.mxu0 0.0
    %495 = vmatprep.subr.mxu0 0.0
    %496 = vmatpush1.msra.mxu0 0.0
    %497 = vmatprep.subr.mxu0 0.0
    %498 = vmatpush1.msra.mxu0 0.0
    %499 = vmatprep.subr.mxu0 0.0
    %500 = vmatpush1.msra.mxu0 0.0
    %501 = vmatprep.subr.mxu0 0.0
    %502 = vmatpush1.msra.mxu0 0.0
    %503 = vmatprep.subr.mxu0 0.0
    %504 = vmatpush1.msra.mxu0 0.0
    %505 = vmatprep.subr.mxu0 0.0
    %506 = vmatpush1.msra.mxu0 0.0
    %507 = vmatprep.subr.mxu0 0.0
    %508 = vmatpush1.msra.mxu0 0.0
    %509 = vmatprep.subr.mxu0 0.0
    %510 = vmatpush1.msra.mxu0 0.0
    %511 = vmatprep.subr.mxu0 0.0
    %512 = vmatpush1.msra.mxu0 0.0
    %513 = vmatprep.subr.mxu0 0.0
    %514 = vmatpush1.msra.mxu0 0.0
    %515 = vmatprep.subr.mxu0 0.0
    %516 = vmatpush1.msra.mxu0 0.0
    %517 = vmatprep.subr.mxu0 0.0
    %518 = vmatpush1.msra.mxu0 0.0
    %519 = vmatprep.subr.mxu0 0.0
    %520 = vmatpush1.msra.mxu0 0.0
    %521 = vmatprep.mubr.f32.mxu0 0.0
    %522 = vmatmul.mubr.f32.gmra.mrb[0].mxu0 %v455
    %v523 = vpop.f32.mrb[0].mxu0
    %v524 = vadd.f32 0.0, %v523
    %v525 = vpop.f32.mrb[0].mxu0
    %526 = vdwg.mxu0
    %v527 = vrcp.pop %v453
    %v528 = vmul.f32 0.17677669, %v527
    %v529 = vmul.f32 %v524, %v528
    %530 = vst.msk [vmem:[#allocation2] sm:$0xff] %vm368, %v529
    %531 = vrot.lane.b32.xlu0 %v188, 120
    %v532 = vpop.permute.xlu0 %531
    %533 = vrot.lane.b32.xlu0 %v274, 120
    %v534 = vpop.permute.xlu0 %533
    %v535 = vsel %vm368, %v532, 0
    %v537 = vsel %vm368, %v534, 0
    %539 = vmatprep.subr.mxu0 0.0
    %540 = vmatpush1.xpose.msra.mxu0 %v537
    %541 = vmatprep.subr.mxu0 0.0
    %542 = vmatpush1.xpose.msra.mxu0 0.0
    %543 = vmatprep.subr.mxu0 0.0
    %544 = vmatpush1.xpose.msra.mxu0 0.0
    %545 = vmatprep.subr.mxu0 0.0
    %546 = vmatpush1.xpose.msra.mxu0 0.0
    %547 = vmatprep.subr.mxu0 0.0
    %548 = vmatpush1.xpose.msra.mxu0 0.0
    %549 = vmatprep.subr.mxu0 0.0
    %550 = vmatpush1.xpose.msra.mxu0 0.0
    %551 = vmatprep.subr.mxu0 0.0
    %552 = vmatpush1.xpose.msra.mxu0 0.0
    %553 = vmatprep.subr.mxu0 0.0
    %554 = vmatpush1.xpose.msra.mxu0 0.0
    %555 = vmatprep.subr.mxu0 0.0
    %556 = vmatpush1.xpose.msra.mxu0 0.0
    %557 = vmatprep.subr.mxu0 0.0
    %558 = vmatpush1.xpose.msra.mxu0 0.0
    %559 = vmatprep.subr.mxu0 0.0
    %560 = vmatpush1.xpose.msra.mxu0 0.0
    %561 = vmatprep.subr.mxu0 0.0
    %562 = vmatpush1.xpose.msra.mxu0 0.0
    %563 = vmatprep.subr.mxu0 0.0
    %564 = vmatpush1.xpose.msra.mxu0 0.0
    %565 = vmatprep.subr.mxu0 0.0
    %566 = vmatpush1.xpose.msra.mxu0 0.0
    %567 = vmatprep.subr.mxu0 0.0
    %568 = vmatpush1.xpose.msra.mxu0 0.0
    %569 = vmatprep.subr.mxu0 0.0
    %570 = vmatpush1.xpose.msra.mxu0 0.0
    %571 = vmatprep.subr.mxu0 0.0
    %572 = vmatpush1.xpose.msra.mxu0 0.0
    %573 = vmatprep.subr.mxu0 0.0
    %574 = vmatpush1.xpose.msra.mxu0 0.0
    %575 = vmatprep.subr.mxu0 0.0
    %576 = vmatpush1.xpose.msra.mxu0 0.0
    %577 = vmatprep.subr.mxu0 0.0
    %578 = vmatpush1.xpose.msra.mxu0 0.0
    %579 = vmatprep.subr.mxu0 0.0
    %580 = vmatpush1.xpose.msra.mxu0 0.0
    %581 = vmatprep.subr.mxu0 0.0
    %582 = vmatpush1.xpose.msra.mxu0 0.0
    %583 = vmatprep.subr.mxu0 0.0
    %584 = vmatpush1.xpose.msra.mxu0 0.0
    %585 = vmatprep.subr.mxu0 0.0
    %586 = vmatpush1.xpose.msra.mxu0 0.0
    %587 = vmatprep.subr.mxu0 0.0
    %588 = vmatpush1.xpose.msra.mxu0 0.0
    %589 = vmatprep.subr.mxu0 0.0
    %590 = vmatpush1.xpose.msra.mxu0 0.0
    %591 = vmatprep.subr.mxu0 0.0
    %592 = vmatpush1.xpose.msra.mxu0 0.0
    %593 = vmatprep.subr.mxu0 0.0
    %594 = vmatpush1.xpose.msra.mxu0 0.0
    %595 = vmatprep.subr.mxu0 0.0
    %596 = vmatpush1.xpose.msra.mxu0 0.0
    %597 = vmatprep.subr.mxu0 0.0
    %598 = vmatpush1.xpose.msra.mxu0 0.0
    %599 = vmatprep.subr.mxu0 0.0
    %600 = vmatpush1.xpose.msra.mxu0 0.0
    %601 = vmatprep.subr.mxu0 0.0
    %602 = vmatpush1.xpose.msra.mxu0 0.0
    %603 = vmatprep.mubr.f32.mxu0 0.0
    %604 = vmatmul.mubr.f32.gmra.mrb[0].mxu0 %v535
    %v605 = vpop.f32.mrb[0].mxu0
    %v606 = vadd.f32 0.0, %v605
    %v607 = vpop.f32.mrb[0].mxu0
    %608 = vdwg.mxu0
    %v609 = vsel %vm368, %v606, -inf
    %610 = vmax.xlane.f32.xlu0 %v609
    %v611 = vpop.xlane.xlu0 %610
    %v612 = vsub.f32 %v606, %v611
    %v613 = vmul.f32 %v612, 1.442695
    %v614 = vpow.pop %v613
    %v615 = vsel %vm368, %v614, 0.0
    %616 = vadd.xlane.f32.xlu0 %v615
    %v617 = vpop.xlane.xlu0 %616
    %619 = vrot.lane.b32.xlu0 %v360, 120
    %v620 = vpop.permute.xlu0 %619
    %v623 = vsel %vm368, %v614, 0
    %625 = vmatprep.subr.mxu0 0.0
    %626 = vmatpush1.msra.mxu0 %v620
    %627 = vmatprep.subr.mxu0 0.0
    %628 = vmatpush1.msra.mxu0 0.0
    %629 = vmatprep.subr.mxu0 0.0
    %630 = vmatpush1.msra.mxu0 0.0
    %631 = vmatprep.subr.mxu0 0.0
    %632 = vmatpush1.msra.mxu0 0.0
    %633 = vmatprep.subr.mxu0 0.0
    %634 = vmatpush1.msra.mxu0 0.0
    %635 = vmatprep.subr.mxu0 0.0
    %636 = vmatpush1.msra.mxu0 0.0
    %637 = vmatprep.subr.mxu0 0.0
    %638 = vmatpush1.msra.mxu0 0.0
    %639 = vmatprep.subr.mxu0 0.0
    %640 = vmatpush1.msra.mxu0 0.0
    %641 = vmatprep.subr.mxu0 0.0
    %642 = vmatpush1.msra.mxu0 0.0
    %643 = vmatprep.subr.mxu0 0.0
    %644 = vmatpush1.msra.mxu0 0.0
    %645 = vmatprep.subr.mxu0 0.0
    %646 = vmatpush1.msra.mxu0 0.0
    %647 = vmatprep.subr.mxu0 0.0
    %648 = vmatpush1.msra.mxu0 0.0
    %649 = vmatprep.subr.mxu0 0.0
    %650 = vmatpush1.msra.mxu0 0.0
    %651 = vmatprep.subr.mxu0 0.0
    %652 = vmatpush1.msra.mxu0 0.0
    %653 = vmatprep.subr.mxu0 0.0
    %654 = vmatpush1.msra.mxu0 0.0
    %655 = vmatprep.subr.mxu0 0.0
    %656 = vmatpush1.msra.mxu0 0.0
    %657 = vmatprep.subr.mxu0 0.0
    %658 = vmatpush1.msra.mxu0 0.0
    %659 = vmatprep.subr.mxu0 0.0
    %660 = vmatpush1.msra.mxu0 0.0
    %661 = vmatprep.subr.mxu0 0.0
    %662 = vmatpush1.msra.mxu0 0.0
    %663 = vmatprep.subr.mxu0 0.0
    %664 = vmatpush1.msra.mxu0 0.0
    %665 = vmatprep.subr.mxu0 0.0
    %666 = vmatpush1.msra.mxu0 0.0
    %667 = vmatprep.subr.mxu0 0.0
    %668 = vmatpush1.msra.mxu0 0.0
    %669 = vmatprep.subr.mxu0 0.0
    %670 = vmatpush1.msra.mxu0 0.0
    %671 = vmatprep.subr.mxu0 0.0
    %672 = vmatpush1.msra.mxu0 0.0
    %673 = vmatprep.subr.mxu0 0.0
    %674 = vmatpush1.msra.mxu0 0.0
    %675 = vmatprep.subr.mxu0 0.0
    %676 = vmatpush1.msra.mxu0 0.0
    %677 = vmatprep.subr.mxu0 0.0
    %678 = vmatpush1.msra.mxu0 0.0
    %679 = vmatprep.subr.mxu0 0.0
    %680 = vmatpush1.msra.mxu0 0.0
    %681 = vmatprep.subr.mxu0 0.0
    %682 = vmatpush1.msra.mxu0 0.0
    %683 = vmatprep.subr.mxu0 0.0
    %684 = vmatpush1.msra.mxu0 0.0
    %685 = vmatprep.subr.mxu0 0.0
    %686 = vmatpush1.msra.mxu0 0.0
    %687 = vmatprep.subr.mxu0 0.0
    %688 = vmatpush1.msra.mxu0 0.0
    %689 = vmatprep.mubr.f32.mxu0 0.0
    %690 = vmatmul.mubr.f32.gmra.mrb[0].mxu0 %v623
    %v691 = vpop.f32.mrb[0].mxu0
    %v692 = vadd.f32 0.0, %v691
    %v693 = vpop.f32.mrb[0].mxu0
    %694 = vdwg.mxu0
    %v695 = vrcp.pop %v617
    %v696 = vmul.f32 0.17677669, %v695
    %v697 = vmul.f32 %v692, %v696
    %699 = vrot.lane.b32.xlu0 %v697, 8
    %v700 = vpop.permute.xlu0 %699
    %vm702 = vcmask 130112
    %703 = vst.msk [vmem:[#allocation2] sm:$0xff] %vm702, %v700
    %704 = vrot.lane.b32.xlu0 %v188, 112
    %v705 = vpop.permute.xlu0 %704
    %706 = vrot.lane.b32.xlu0 %v274, 112
    %v707 = vpop.permute.xlu0 %706
    %v708 = vsel %vm368, %v705, 0
    %v710 = vsel %vm368, %v707, 0
    %712 = vmatprep.subr.mxu0 0.0
    %713 = vmatpush1.xpose.msra.mxu0 %v710
    %714 = vmatprep.subr.mxu0 0.0
    %715 = vmatpush1.xpose.msra.mxu0 0.0
    %716 = vmatprep.subr.mxu0 0.0
    %717 = vmatpush1.xpose.msra.mxu0 0.0
    %718 = vmatprep.subr.mxu0 0.0
    %719 = vmatpush1.xpose.msra.mxu0 0.0
    %720 = vmatprep.subr.mxu0 0.0
    %721 = vmatpush1.xpose.msra.mxu0 0.0
    %722 = vmatprep.subr.mxu0 0.0
    %723 = vmatpush1.xpose.msra.mxu0 0.0
    %724 = vmatprep.subr.mxu0 0.0
    %725 = vmatpush1.xpose.msra.mxu0 0.0
    %726 = vmatprep.subr.mxu0 0.0
    %727 = vmatpush1.xpose.msra.mxu0 0.0
    %728 = vmatprep.subr.mxu0 0.0
    %729 = vmatpush1.xpose.msra.mxu0 0.0
    %730 = vmatprep.subr.mxu0 0.0
    %731 = vmatpush1.xpose.msra.mxu0 0.0
    %732 = vmatprep.subr.mxu0 0.0
    %733 = vmatpush1.xpose.msra.mxu0 0.0
    %734 = vmatprep.subr.mxu0 0.0
    %735 = vmatpush1.xpose.msra.mxu0 0.0
    %736 = vmatprep.subr.mxu0 0.0
    %737 = vmatpush1.xpose.msra.mxu0 0.0
    %738 = vmatprep.subr.mxu0 0.0
    %739 = vmatpush1.xpose.msra.mxu0 0.0
    %740 = vmatprep.subr.mxu0 0.0
    %741 = vmatpush1.xpose.msra.mxu0 0.0
    %742 = vmatprep.subr.mxu0 0.0
    %743 = vmatpush1.xpose.msra.mxu0 0.0
    %744 = vmatprep.subr.mxu0 0.0
    %745 = vmatpush1.xpose.msra.mxu0 0.0
    %746 = vmatprep.subr.mxu0 0.0
    %747 = vmatpush1.xpose.msra.mxu0 0.0
    %748 = vmatprep.subr.mxu0 0.0
    %749 = vmatpush1.xpose.msra.mxu0 0.0
    %750 = vmatprep.subr.mxu0 0.0
    %751 = vmatpush1.xpose.msra.mxu0 0.0
    %752 = vmatprep.subr.mxu0 0.0
    %753 = vmatpush1.xpose.msra.mxu0 0.0
    %754 = vmatprep.subr.mxu0 0.0
    %755 = vmatpush1.xpose.msra.mxu0 0.0
    %756 = vmatprep.subr.mxu0 0.0
    %757 = vmatpush1.xpose.msra.mxu0 0.0
    %758 = vmatprep.subr.mxu0 0.0
    %759 = vmatpush1.xpose.msra.mxu0 0.0
    %760 = vmatprep.subr.mxu0 0.0
    %761 = vmatpush1.xpose.msra.mxu0 0.0
    %762 = vmatprep.subr.mxu0 0.0
    %763 = vmatpush1.xpose.msra.mxu0 0.0
    %764 = vmatprep.subr.mxu0 0.0
    %765 = vmatpush1.xpose.msra.mxu0 0.0
    %766 = vmatprep.subr.mxu0 0.0
    %767 = vmatpush1.xpose.msra.mxu0 0.0
    %768 = vmatprep.subr.mxu0 0.0
    %769 = vmatpush1.xpose.msra.mxu0 0.0
    %770 = vmatprep.subr.mxu0 0.0
    %771 = vmatpush1.xpose.msra.mxu0 0.0
    %772 = vmatprep.subr.mxu0 0.0
    %773 = vmatpush1.xpose.msra.mxu0 0.0
    %774 = vmatprep.subr.mxu0 0.0
    %775 = vmatpush1.xpose.msra.mxu0 0.0
    %776 = vmatprep.mubr.f32.mxu0 0.0
    %777 = vmatmul.mubr.f32.gmra.mrb[0].mxu0 %v708
    %v778 = vpop.f32.mrb[0].mxu0
    %v779 = vadd.f32 0.0, %v778
    %v780 = vpop.f32.mrb[0].mxu0
    %781 = vdwg.mxu0
    %v782 = vsel %vm368, %v779, -inf
    %783 = vmax.xlane.f32.xlu0 %v782
    %v784 = vpop.xlane.xlu0 %783
    %v785 = vsub.f32 %v779, %v784
    %v786 = vmul.f32 %v785, 1.442695
    %v787 = vpow.pop %v786
    %v788 = vsel %vm368, %v787, 0.0
    %789 = vadd.xlane.f32.xlu0 %v788
    %v790 = vpop.xlane.xlu0 %789
    %791 = vrot.lane.b32.xlu0 %v360, 112
    %v792 = vpop.permute.xlu0 %791
    %v795 = vsel %vm368, %v787, 0
    %797 = vmatprep.subr.mxu0 0.0
    %798 = vmatpush1.msra.mxu0 %v792
    %799 = vmatprep.subr.mxu0 0.0
    %800 = vmatpush1.msra.mxu0 0.0
    %801 = vmatprep.subr.mxu0 0.0
    %802 = vmatpush1.msra.mxu0 0.0
    %803 = vmatprep.subr.mxu0 0.0
    %804 = vmatpush1.msra.mxu0 0.0
    %805 = vmatprep.subr.mxu0 0.0
    %806 = vmatpush1.msra.mxu0 0.0
    %807 = vmatprep.subr.mxu0 0.0
    %808 = vmatpush1.msra.mxu0 0.0
    %809 = vmatprep.subr.mxu0 0.0
    %810 = vmatpush1.msra.mxu0 0.0
    %811 = vmatprep.subr.mxu0 0.0
    %812 = vmatpush1.msra.mxu0 0.0
    %813 = vmatprep.subr.mxu0 0.0
    %814 = vmatpush1.msra.mxu0 0.0
    %815 = vmatprep.subr.mxu0 0.0
    %816 = vmatpush1.msra.mxu0 0.0
    %817 = vmatprep.subr.mxu0 0.0
    %818 = vmatpush1.msra.mxu0 0.0
    %819 = vmatprep.subr.mxu0 0.0
    %820 = vmatpush1.msra.mxu0 0.0
    %821 = vmatprep.subr.mxu0 0.0
    %822 = vmatpush1.msra.mxu0 0.0
    %823 = vmatprep.subr.mxu0 0.0
    %824 = vmatpush1.msra.mxu0 0.0
    %825 = vmatprep.subr.mxu0 0.0
    %826 = vmatpush1.msra.mxu0 0.0
    %827 = vmatprep.subr.mxu0 0.0
    %828 = vmatpush1.msra.mxu0 0.0
    %829 = vmatprep.subr.mxu0 0.0
    %830 = vmatpush1.msra.mxu0 0.0
    %831 = vmatprep.subr.mxu0 0.0
    %832 = vmatpush1.msra.mxu0 0.0
    %833 = vmatprep.subr.mxu0 0.0
    %834 = vmatpush1.msra.mxu0 0.0
    %835 = vmatprep.subr.mxu0 0.0
    %836 = vmatpush1.msra.mxu0 0.0
    %837 = vmatprep.subr.mxu0 0.0
    %838 = vmatpush1.msra.mxu0 0.0
    %839 = vmatprep.subr.mxu0 0.0
    %840 = vmatpush1.msra.mxu0 0.0
    %841 = vmatprep.subr.mxu0 0.0
    %842 = vmatpush1.msra.mxu0 0.0
    %843 = vmatprep.subr.mxu0 0.0
    %844 = vmatpush1.msra.mxu0 0.0
    %845 = vmatprep.subr.mxu0 0.0
    %846 = vmatpush1.msra.mxu0 0.0
    %847 = vmatprep.subr.mxu0 0.0
    %848 = vmatpush1.msra.mxu0 0.0
    %849 = vmatprep.subr.mxu0 0.0
    %850 = vmatpush1.msra.mxu0 0.0
    %851 = vmatprep.subr.mxu0 0.0
    %852 = vmatpush1.msra.mxu0 0.0
    %853 = vmatprep.subr.mxu0 0.0
    %854 = vmatpush1.msra.mxu0 0.0
    %855 = vmatprep.subr.mxu0 0.0
    %856 = vmatpush1.msra.mxu0 0.0
    %857 = vmatprep.subr.mxu0 0.0
    %858 = vmatpush1.msra.mxu0 0.0
    %859 = vmatprep.subr.mxu0 0.0
    %860 = vmatpush1.msra.mxu0 0.0
    %861 = vmatprep.mubr.f32.mxu0 0.0
    %862 = vmatmul.mubr.f32.gmra.mrb[0].mxu0 %v795
    %v863 = vpop.f32.mrb[0].mxu0
    %v864 = vadd.f32 0.0, %v863
    %v865 = vpop.f32.mrb[0].mxu0
    %866 = vdwg.mxu0
    %v867 = vrcp.pop %v790
    %v868 = vmul.f32 0.17677669, %v867
    %v869 = vmul.f32 %v864, %v868
    %871 = vrot.lane.b32.xlu0 %v869, 16
    %v872 = vpop.permute.xlu0 %871
    %vm874 = vcmask 195712
    %875 = vst.msk [vmem:[#allocation2] sm:$0xff] %vm874, %v872
    %876 = vrot.lane.b32.xlu0 %v188, 104
    %v877 = vpop.permute.xlu0 %876
    %878 = vrot.lane.b32.xlu0 %v274, 104
    %v879 = vpop.permute.xlu0 %878
    %v880 = vsel %vm368, %v877, 0
    %v882 = vsel %vm368, %v879, 0
    %884 = vmatprep.subr.mxu0 0.0
    %885 = vmatpush1.xpose.msra.mxu0 %v882
    %886 = vmatprep.subr.mxu0 0.0
    %887 = vmatpush1.xpose.msra.mxu0 0.0
    %888 = vmatprep.subr.mxu0 0.0
    %889 = vmatpush1.xpose.msra.mxu0 0.0
    %890 = vmatprep.subr.mxu0 0.0
    %891 = vmatpush1.xpose.msra.mxu0 0.0
    %892 = vmatprep.subr.mxu0 0.0
    %893 = vmatpush1.xpose.msra.mxu0 0.0
    %894 = vmatprep.subr.mxu0 0.0
    %895 = vmatpush1.xpose.msra.mxu0 0.0
    %896 = vmatprep.subr.mxu0 0.0
    %897 = vmatpush1.xpose.msra.mxu0 0.0
    %898 = vmatprep.subr.mxu0 0.0
    %899 = vmatpush1.xpose.msra.mxu0 0.0
    %900 = vmatprep.subr.mxu0 0.0
    %901 = vmatpush1.xpose.msra.mxu0 0.0
    %902 = vmatprep.subr.mxu0 0.0
    %903 = vmatpush1.xpose.msra.mxu0 0.0
    %904 = vmatprep.subr.mxu0 0.0
    %905 = vmatpush1.xpose.msra.mxu0 0.0
    %906 = vmatprep.subr.mxu0 0.0
    %907 = vmatpush1.xpose.msra.mxu0 0.0
    %908 = vmatprep.subr.mxu0 0.0
    %909 = vmatpush1.xpose.msra.mxu0 0.0
    %910 = vmatprep.subr.mxu0 0.0
    %911 = vmatpush1.xpose.msra.mxu0 0.0
    %912 = vmatprep.subr.mxu0 0.0
    %913 = vmatpush1.xpose.msra.mxu0 0.0
    %914 = vmatprep.subr.mxu0 0.0
    %915 = vmatpush1.xpose.msra.mxu0 0.0
    %916 = vmatprep.subr.mxu0 0.0
    %917 = vmatpush1.xpose.msra.mxu0 0.0
    %918 = vmatprep.subr.mxu0 0.0
    %919 = vmatpush1.xpose.msra.mxu0 0.0
    %920 = vmatprep.subr.mxu0 0.0
    %921 = vmatpush1.xpose.msra.mxu0 0.0
    %922 = vmatprep.subr.mxu0 0.0
    %923 = vmatpush1.xpose.msra.mxu0 0.0
    %924 = vmatprep.subr.mxu0 0.0
    %925 = vmatpush1.xpose.msra.mxu0 0.0
    %926 = vmatprep.subr.mxu0 0.0
    %927 = vmatpush1.xpose.msra.mxu0 0.0
    %928 = vmatprep.subr.mxu0 0.0
    %929 = vmatpush1.xpose.msra.mxu0 0.0
    %930 = vmatprep.subr.mxu0 0.0
    %931 = vmatpush1.xpose.msra.mxu0 0.0
    %932 = vmatprep.subr.mxu0 0.0
    %933 = vmatpush1.xpose.msra.mxu0 0.0
    %934 = vmatprep.subr.mxu0 0.0
    %935 = vmatpush1.xpose.msra.mxu0 0.0
    %936 = vmatprep.subr.mxu0 0.0
    %937 = vmatpush1.xpose.msra.mxu0 0.0
    %938 = vmatprep.subr.mxu0 0.0
    %939 = vmatpush1.xpose.msra.mxu0 0.0
    %940 = vmatprep.subr.mxu0 0.0
    %941 = vmatpush1.xpose.msra.mxu0 0.0
    %942 = vmatprep.subr.mxu0 0.0
    %943 = vmatpush1.xpose.msra.mxu0 0.0
    %944 = vmatprep.subr.mxu0 0.0
    %945 = vmatpush1.xpose.msra.mxu0 0.0
    %946 = vmatprep.subr.mxu0 0.0
    %947 = vmatpush1.xpose.msra.mxu0 0.0
    %948 = vmatprep.mubr.f32.mxu0 0.0
    %949 = vmatmul.mubr.f32.gmra.mrb[0].mxu0 %v880
    %v950 = vpop.f32.mrb[0].mxu0
    %v951 = vadd.f32 0.0, %v950
    %v952 = vpop.f32.mrb[0].mxu0
    %953 = vdwg.mxu0
    %v954 = vsel %vm368, %v951, -inf
    %955 = vmax.xlane.f32.xlu0 %v954
    %v956 = vpop.xlane.xlu0 %955
    %v957 = vsub.f32 %v951, %v956
    %v958 = vmul.f32 %v957, 1.442695
    %v959 = vpow.pop %v958
    %v960 = vsel %vm368, %v959, 0.0
    %961 = vadd.xlane.f32.xlu0 %v960
    %v962 = vpop.xlane.xlu0 %961
    %963 = vrot.lane.b32.xlu0 %v360, 104
    %v964 = vpop.permute.xlu0 %963
    %v967 = vsel %vm368, %v959, 0
    %969 = vmatprep.subr.mxu0 0.0
    %970 = vmatpush1.msra.mxu0 %v964
    %971 = vmatprep.subr.mxu0 0.0
    %972 = vmatpush1.msra.mxu0 0.0
    %973 = vmatprep.subr.mxu0 0.0
    %974 = vmatpush1.msra.mxu0 0.0
    %975 = vmatprep.subr.mxu0 0.0
    %976 = vmatpush1.msra.mxu0 0.0
    %977 = vmatprep.subr.mxu0 0.0
    %978 = vmatpush1.msra.mxu0 0.0
    %979 = vmatprep.subr.mxu0 0.0
    %980 = vmatpush1.msra.mxu0 0.0
    %981 = vmatprep.subr.mxu0 0.0
    %982 = vmatpush1.msra.mxu0 0.0
    %983 = vmatprep.subr.mxu0 0.0
    %984 = vmatpush1.msra.mxu0 0.0
    %985 = vmatprep.subr.mxu0 0.0
    %986 = vmatpush1.msra.mxu0 0.0
    %987 = vmatprep.subr.mxu0 0.0
    %988 = vmatpush1.msra.mxu0 0.0
    %989 = vmatprep.subr.mxu0 0.0
    %990 = vmatpush1.msra.mxu0 0.0
    %991 = vmatprep.subr.mxu0 0.0
    %992 = vmatpush1.msra.mxu0 0.0
    %993 = vmatprep.subr.mxu0 0.0
    %994 = vmatpush1.msra.mxu0 0.0
    %995 = vmatprep.subr.mxu0 0.0
    %996 = vmatpush1.msra.mxu0 0.0
    %997 = vmatprep.subr.mxu0 0.0
    %998 = vmatpush1.msra.mxu0 0.0
    %999 = vmatprep.subr.mxu0 0.0
    %1000 = vmatpush1.msra.mxu0 0.0
    %1001 = vmatprep.subr.mxu0 0.0
    %1002 = vmatpush1.msra.mxu0 0.0
    %1003 = vmatprep.subr.mxu0 0.0
    %1004 = vmatpush1.msra.mxu0 0.0
    %1005 = vmatprep.subr.mxu0 0.0
    %1006 = vmatpush1.msra.mxu0 0.0
    %1007 = vmatprep.subr.mxu0 0.0
    %1008 = vmatpush1.msra.mxu0 0.0
    %1009 = vmatprep.subr.mxu0 0.0
    %1010 = vmatpush1.msra.mxu0 0.0
    %1011 = vmatprep.subr.mxu0 0.0
    %1012 = vmatpush1.msra.mxu0 0.0
    %1013 = vmatprep.subr.mxu0 0.0
    %1014 = vmatpush1.msra.mxu0 0.0
    %1015 = vmatprep.subr.mxu0 0.0
    %1016 = vmatpush1.msra.mxu0 0.0
    %1017 = vmatprep.subr.mxu0 0.0
    %1018 = vmatpush1.msra.mxu0 0.0
    %1019 = vmatprep.subr.mxu0 0.0
    %1020 = vmatpush1.msra.mxu0 0.0
    %1021 = vmatprep.subr.mxu0 0.0
    %1022 = vmatpush1.msra.mxu0 0.0
    %1023 = vmatprep.subr.mxu0 0.0
    %1024 = vmatpush1.msra.mxu0 0.0
    %1025 = vmatprep.subr.mxu0 0.0
    %1026 = vmatpush1.msra.mxu0 0.0
    %1027 = vmatprep.subr.mxu0 0.0
    %1028 = vmatpush1.msra.mxu0 0.0
    %1029 = vmatprep.subr.mxu0 0.0
    %1030 = vmatpush1.msra.mxu0 0.0
    %1031 = vmatprep.subr.mxu0 0.0
    %1032 = vmatpush1.msra.mxu0 0.0
    %1033 = vmatprep.mubr.f32.mxu0 0.0
    %1034 = vmatmul.mubr.f32.gmra.mrb[0].mxu0 %v967
    %v1035 = vpop.f32.mrb[0].mxu0
    %v1036 = vadd.f32 0.0, %v1035
    %v1037 = vpop.f32.mrb[0].mxu0
    %1038 = vdwg.mxu0
    %v1039 = vrcp.pop %v962
    %v1040 = vmul.f32 0.17677669, %v1039
    %v1041 = vmul.f32 %v1036, %v1040
    %1043 = vrot.lane.b32.xlu0 %v1041, 24
    %v1044 = vpop.permute.xlu0 %1043
    %vm1046 = vcmask 261312
    %1047 = vst.msk [vmem:[#allocation2] sm:$0xff] %vm1046, %v1044
    %v1049 = vsel %vm368, %v193, 0
    %v1052 = vsel %vm368, %v279, 0
    %1054 = vmatprep.subr.mxu0 0.0
    %1055 = vmatpush1.xpose.msra.mxu0 %v1052
    %1056 = vmatprep.subr.mxu0 0.0
    %1057 = vmatpush1.xpose.msra.mxu0 0.0
    %1058 = vmatprep.subr.mxu0 0.0
    %1059 = vmatpush1.xpose.msra.mxu0 0.0
    %1060 = vmatprep.subr.mxu0 0.0
    %1061 = vmatpush1.xpose.msra.mxu0 0.0
    %1062 = vmatprep.subr.mxu0 0.0
    %1063 = vmatpush1.xpose.msra.mxu0 0.0
    %1064 = vmatprep.subr.mxu0 0.0
    %1065 = vmatpush1.xpose.msra.mxu0 0.0
    %1066 = vmatprep.subr.mxu0 0.0
    %1067 = vmatpush1.xpose.msra.mxu0 0.0
    %1068 = vmatprep.subr.mxu0 0.0
    %1069 = vmatpush1.xpose.msra.mxu0 0.0
    %1070 = vmatprep.subr.mxu0 0.0
    %1071 = vmatpush1.xpose.msra.mxu0 0.0
    %1072 = vmatprep.subr.mxu0 0.0
    %1073 = vmatpush1.xpose.msra.mxu0 0.0
    %1074 = vmatprep.subr.mxu0 0.0
    %1075 = vmatpush1.xpose.msra.mxu0 0.0
    %1076 = vmatprep.subr.mxu0 0.0
    %1077 = vmatpush1.xpose.msra.mxu0 0.0
    %1078 = vmatprep.subr.mxu0 0.0
    %1079 = vmatpush1.xpose.msra.mxu0 0.0
    %1080 = vmatprep.subr.mxu0 0.0
    %1081 = vmatpush1.xpose.msra.mxu0 0.0
    %1082 = vmatprep.subr.mxu0 0.0
    %1083 = vmatpush1.xpose.msra.mxu0 0.0
    %1084 = vmatprep.subr.mxu0 0.0
    %1085 = vmatpush1.xpose.msra.mxu0 0.0
    %1086 = vmatprep.subr.mxu0 0.0
    %1087 = vmatpush1.xpose.msra.mxu0 0.0
    %1088 = vmatprep.subr.mxu0 0.0
    %1089 = vmatpush1.xpose.msra.mxu0 0.0
    %1090 = vmatprep.subr.mxu0 0.0
    %1091 = vmatpush1.xpose.msra.mxu0 0.0
    %1092 = vmatprep.subr.mxu0 0.0
    %1093 = vmatpush1.xpose.msra.mxu0 0.0
    %1094 = vmatprep.subr.mxu0 0.0
    %1095 = vmatpush1.xpose.msra.mxu0 0.0
    %1096 = vmatprep.subr.mxu0 0.0
    %1097 = vmatpush1.xpose.msra.mxu0 0.0
    %1098 = vmatprep.subr.mxu0 0.0
    %1099 = vmatpush1.xpose.msra.mxu0 0.0
    %1100 = vmatprep.subr.mxu0 0.0
    %1101 = vmatpush1.xpose.msra.mxu0 0.0
    %1102 = vmatprep.subr.mxu0 0.0
    %1103 = vmatpush1.xpose.msra.mxu0 0.0
    %1104 = vmatprep.subr.mxu0 0.0
    %1105 = vmatpush1.xpose.msra.mxu0 0.0
    %1106 = vmatprep.subr.mxu0 0.0
    %1107 = vmatpush1.xpose.msra.mxu0 0.0
    %1108 = vmatprep.subr.mxu0 0.0
    %1109 = vmatpush1.xpose.msra.mxu0 0.0
    %1110 = vmatprep.subr.mxu0 0.0
    %1111 = vmatpush1.xpose.msra.mxu0 0.0
    %1112 = vmatprep.subr.mxu0 0.0
    %1113 = vmatpush1.xpose.msra.mxu0 0.0
    %1114 = vmatprep.subr.mxu0 0.0
    %1115 = vmatpush1.xpose.msra.mxu0 0.0
    %1116 = vmatprep.subr.mxu0 0.0
    %1117 = vmatpush1.xpose.msra.mxu0 0.0
    %1118 = vmatprep.mubr.f32.mxu0 0.0
    %1119 = vmatmul.mubr.f32.gmra.mrb[0].mxu0 %v1049
    %v1120 = vpop.f32.mrb[0].mxu0
    %v1121 = vadd.f32 0.0, %v1120
    %v1122 = vpop.f32.mrb[0].mxu0
    %1123 = vdwg.mxu0
    %v1124 = vsel %vm368, %v1121, -inf
    %1125 = vmax.xlane.f32.xlu0 %v1124
    %v1126 = vpop.xlane.xlu0 %1125
    %v1127 = vsub.f32 %v1121, %v1126
    %v1128 = vmul.f32 %v1127, 1.442695
    %v1129 = vpow.pop %v1128
    %v1130 = vsel %vm368, %v1129, 0.0
    %1131 = vadd.xlane.f32.xlu0 %v1130
    %v1132 = vpop.xlane.xlu0 %1131
    %v1134 = vsel %vm368, %v1129, 0
    %1136 = vmatprep.subr.mxu0 0.0
    %1137 = vmatpush1.msra.mxu0 %v365
    %1138 = vmatprep.subr.mxu0 0.0
    %1139 = vmatpush1.msra.mxu0 0.0
    %1140 = vmatprep.subr.mxu0 0.0
    %1141 = vmatpush1.msra.mxu0 0.0
    %1142 = vmatprep.subr.mxu0 0.0
    %1143 = vmatpush1.msra.mxu0 0.0
    %1144 = vmatprep.subr.mxu0 0.0
    %1145 = vmatpush1.msra.mxu0 0.0
    %1146 = vmatprep.subr.mxu0 0.0
    %1147 = vmatpush1.msra.mxu0 0.0
    %1148 = vmatprep.subr.mxu0 0.0
    %1149 = vmatpush1.msra.mxu0 0.0
    %1150 = vmatprep.subr.mxu0 0.0
    %1151 = vmatpush1.msra.mxu0 0.0
    %1152 = vmatprep.subr.mxu0 0.0
    %1153 = vmatpush1.msra.mxu0 0.0
    %1154 = vmatprep.subr.mxu0 0.0
    %1155 = vmatpush1.msra.mxu0 0.0
    %1156 = vmatprep.subr.mxu0 0.0
    %1157 = vmatpush1.msra.mxu0 0.0
    %1158 = vmatprep.subr.mxu0 0.0
    %1159 = vmatpush1.msra.mxu0 0.0
    %1160 = vmatprep.subr.mxu0 0.0
    %1161 = vmatpush1.msra.mxu0 0.0
    %1162 = vmatprep.subr.mxu0 0.0
    %1163 = vmatpush1.msra.mxu0 0.0
    %1164 = vmatprep.subr.mxu0 0.0
    %1165 = vmatpush1.msra.mxu0 0.0
    %1166 = vmatprep.subr.mxu0 0.0
    %1167 = vmatpush1.msra.mxu0 0.0
    %1168 = vmatprep.subr.mxu0 0.0
    %1169 = vmatpush1.msra.mxu0 0.0
    %1170 = vmatprep.subr.mxu0 0.0
    %1171 = vmatpush1.msra.mxu0 0.0
    %1172 = vmatprep.subr.mxu0 0.0
    %1173 = vmatpush1.msra.mxu0 0.0
    %1174 = vmatprep.subr.mxu0 0.0
    %1175 = vmatpush1.msra.mxu0 0.0
    %1176 = vmatprep.subr.mxu0 0.0
    %1177 = vmatpush1.msra.mxu0 0.0
    %1178 = vmatprep.subr.mxu0 0.0
    %1179 = vmatpush1.msra.mxu0 0.0
    %1180 = vmatprep.subr.mxu0 0.0
    %1181 = vmatpush1.msra.mxu0 0.0
    %1182 = vmatprep.subr.mxu0 0.0
    %1183 = vmatpush1.msra.mxu0 0.0
    %1184 = vmatprep.subr.mxu0 0.0
    %1185 = vmatpush1.msra.mxu0 0.0
    %1186 = vmatprep.subr.mxu0 0.0
    %1187 = vmatpush1.msra.mxu0 0.0
    %1188 = vmatprep.subr.mxu0 0.0
    %1189 = vmatpush1.msra.mxu0 0.0
    %1190 = vmatprep.subr.mxu0 0.0
    %1191 = vmatpush1.msra.mxu0 0.0
    %1192 = vmatprep.subr.mxu0 0.0
    %1193 = vmatpush1.msra.mxu0 0.0
    %1194 = vmatprep.subr.mxu0 0.0
    %1195 = vmatpush1.msra.mxu0 0.0
    %1196 = vmatprep.subr.mxu0 0.0
    %1197 = vmatpush1.msra.mxu0 0.0
    %1198 = vmatprep.subr.mxu0 0.0
    %1199 = vmatpush1.msra.mxu0 0.0
    %1200 = vmatprep.mubr.f32.mxu0 0.0
    %1201 = vmatmul.mubr.f32.gmra.mrb[0].mxu0 %v1134
    %v1202 = vpop.f32.mrb[0].mxu0
    %v1203 = vadd.f32 0.0, %v1202
    %v1204 = vpop.f32.mrb[0].mxu0
    %1205 = vdwg.mxu0
    %v1206 = vrcp.pop %v1132
    %v1207 = vmul.f32 0.17677669, %v1206
    %v1208 = vmul.f32 %v1203, %v1207
    %1209 = vst.msk [vmem:[#allocation2 + $0x8] sm:$0xff] %vm368, %v1208
    %1210 = vrot.lane.b32.xlu0 %v193, 120
    %v1211 = vpop.permute.xlu0 %1210
    %1212 = vrot.lane.b32.xlu0 %v279, 120
    %v1213 = vpop.permute.xlu0 %1212
    %v1214 = vsel %vm368, %v1211, 0
    %v1216 = vsel %vm368, %v1213, 0
    %1218 = vmatprep.subr.mxu0 0.0
    %1219 = vmatpush1.xpose.msra.mxu0 %v1216
    %1220 = vmatprep.subr.mxu0 0.0
    %1221 = vmatpush1.xpose.msra.mxu0 0.0
    %1222 = vmatprep.subr.mxu0 0.0
    %1223 = vmatpush1.xpose.msra.mxu0 0.0
    %1224 = vmatprep.subr.mxu0 0.0
    %1225 = vmatpush1.xpose.msra.mxu0 0.0
    %1226 = vmatprep.subr.mxu0 0.0
    %1227 = vmatpush1.xpose.msra.mxu0 0.0
    %1228 = vmatprep.subr.mxu0 0.0
    %1229 = vmatpush1.xpose.msra.mxu0 0.0
    %1230 = vmatprep.subr.mxu0 0.0
    %1231 = vmatpush1.xpose.msra.mxu0 0.0
    %1232 = vmatprep.subr.mxu0 0.0
    %1233 = vmatpush1.xpose.msra.mxu0 0.0
    %1234 = vmatprep.subr.mxu0 0.0
    %1235 = vmatpush1.xpose.msra.mxu0 0.0
    %1236 = vmatprep.subr.mxu0 0.0
    %1237 = vmatpush1.xpose.msra.mxu0 0.0
    %1238 = vmatprep.subr.mxu0 0.0
    %1239 = vmatpush1.xpose.msra.mxu0 0.0
    %1240 = vmatprep.subr.mxu0 0.0
    %1241 = vmatpush1.xpose.msra.mxu0 0.0
    %1242 = vmatprep.subr.mxu0 0.0
    %1243 = vmatpush1.xpose.msra.mxu0 0.0
    %1244 = vmatprep.subr.mxu0 0.0
    %1245 = vmatpush1.xpose.msra.mxu0 0.0
    %1246 = vmatprep.subr.mxu0 0.0
    %1247 = vmatpush1.xpose.msra.mxu0 0.0
    %1248 = vmatprep.subr.mxu0 0.0
    %1249 = vmatpush1.xpose.msra.mxu0 0.0
    %1250 = vmatprep.subr.mxu0 0.0
    %1251 = vmatpush1.xpose.msra.mxu0 0.0
    %1252 = vmatprep.subr.mxu0 0.0
    %1253 = vmatpush1.xpose.msra.mxu0 0.0
    %1254 = vmatprep.subr.mxu0 0.0
    %1255 = vmatpush1.xpose.msra.mxu0 0.0
    %1256 = vmatprep.subr.mxu0 0.0
    %1257 = vmatpush1.xpose.msra.mxu0 0.0
    %1258 = vmatprep.subr.mxu0 0.0
    %1259 = vmatpush1.xpose.msra.mxu0 0.0
    %1260 = vmatprep.subr.mxu0 0.0
    %1261 = vmatpush1.xpose.msra.mxu0 0.0
    %1262 = vmatprep.subr.mxu0 0.0
    %1263 = vmatpush1.xpose.msra.mxu0 0.0
    %1264 = vmatprep.subr.mxu0 0.0
    %1265 = vmatpush1.xpose.msra.mxu0 0.0
    %1266 = vmatprep.subr.mxu0 0.0
    %1267 = vmatpush1.xpose.msra.mxu0 0.0
    %1268 = vmatprep.subr.mxu0 0.0
    %1269 = vmatpush1.xpose.msra.mxu0 0.0
    %1270 = vmatprep.subr.mxu0 0.0
    %1271 = vmatpush1.xpose.msra.mxu0 0.0
    %1272 = vmatprep.subr.mxu0 0.0
    %1273 = vmatpush1.xpose.msra.mxu0 0.0
    %1274 = vmatprep.subr.mxu0 0.0
    %1275 = vmatpush1.xpose.msra.mxu0 0.0
    %1276 = vmatprep.subr.mxu0 0.0
    %1277 = vmatpush1.xpose.msra.mxu0 0.0
    %1278 = vmatprep.subr.mxu0 0.0
    %1279 = vmatpush1.xpose.msra.mxu0 0.0
    %1280 = vmatprep.subr.mxu0 0.0
    %1281 = vmatpush1.xpose.msra.mxu0 0.0
    %1282 = vmatprep.mubr.f32.mxu0 0.0
    %1283 = vmatmul.mubr.f32.gmra.mrb[0].mxu0 %v1214
    %v1284 = vpop.f32.mrb[0].mxu0
    %v1285 = vadd.f32 0.0, %v1284
    %v1286 = vpop.f32.mrb[0].mxu0
    %1287 = vdwg.mxu0
    %v1288 = vsel %vm368, %v1285, -inf
    %1289 = vmax.xlane.f32.xlu0 %v1288
    %v1290 = vpop.xlane.xlu0 %1289
    %v1291 = vsub.f32 %v1285, %v1290
    %v1292 = vmul.f32 %v1291, 1.442695
    %v1293 = vpow.pop %v1292
    %v1294 = vsel %vm368, %v1293, 0.0
    %1295 = vadd.xlane.f32.xlu0 %v1294
    %v1296 = vpop.xlane.xlu0 %1295
    %1298 = vrot.lane.b32.xlu0 %v365, 120
    %v1299 = vpop.permute.xlu0 %1298
    %v1302 = vsel %vm368, %v1293, 0
    %1304 = vmatprep.subr.mxu0 0.0
    %1305 = vmatpush1.msra.mxu0 %v1299
    %1306 = vmatprep.subr.mxu0 0.0
    %1307 = vmatpush1.msra.mxu0 0.0
    %1308 = vmatprep.subr.mxu0 0.0
    %1309 = vmatpush1.msra.mxu0 0.0
    %1310 = vmatprep.subr.mxu0 0.0
    %1311 = vmatpush1.msra.mxu0 0.0
    %1312 = vmatprep.subr.mxu0 0.0
    %1313 = vmatpush1.msra.mxu0 0.0
    %1314 = vmatprep.subr.mxu0 0.0
    %1315 = vmatpush1.msra.mxu0 0.0
    %1316 = vmatprep.subr.mxu0 0.0
    %1317 = vmatpush1.msra.mxu0 0.0
    %1318 = vmatprep.subr.mxu0 0.0
    %1319 = vmatpush1.msra.mxu0 0.0
    %1320 = vmatprep.subr.mxu0 0.0
    %1321 = vmatpush1.msra.mxu0 0.0
    %1322 = vmatprep.subr.mxu0 0.0
    %1323 = vmatpush1.msra.mxu0 0.0
    %1324 = vmatprep.subr.mxu0 0.0
    %1325 = vmatpush1.msra.mxu0 0.0
    %1326 = vmatprep.subr.mxu0 0.0
    %1327 = vmatpush1.msra.mxu0 0.0
    %1328 = vmatprep.subr.mxu0 0.0
    %1329 = vmatpush1.msra.mxu0 0.0
    %1330 = vmatprep.subr.mxu0 0.0
    %1331 = vmatpush1.msra.mxu0 0.0
    %1332 = vmatprep.subr.mxu0 0.0
    %1333 = vmatpush1.msra.mxu0 0.0
    %1334 = vmatprep.subr.mxu0 0.0
    %1335 = vmatpush1.msra.mxu0 0.0
    %1336 = vmatprep.subr.mxu0 0.0
    %1337 = vmatpush1.msra.mxu0 0.0
    %1338 = vmatprep.subr.mxu0 0.0
    %1339 = vmatpush1.msra.mxu0 0.0
    %1340 = vmatprep.subr.mxu0 0.0
    %1341 = vmatpush1.msra.mxu0 0.0
    %1342 = vmatprep.subr.mxu0 0.0
    %1343 = vmatpush1.msra.mxu0 0.0
    %1344 = vmatprep.subr.mxu0 0.0
    %1345 = vmatpush1.msra.mxu0 0.0
    %1346 = vmatprep.subr.mxu0 0.0
    %1347 = vmatpush1.msra.mxu0 0.0
    %1348 = vmatprep.subr.mxu0 0.0
    %1349 = vmatpush1.msra.mxu0 0.0
    %1350 = vmatprep.subr.mxu0 0.0
    %1351 = vmatpush1.msra.mxu0 0.0
    %1352 = vmatprep.subr.mxu0 0.0
    %1353 = vmatpush1.msra.mxu0 0.0
    %1354 = vmatprep.subr.mxu0 0.0
    %1355 = vmatpush1.msra.mxu0 0.0
    %1356 = vmatprep.subr.mxu0 0.0
    %1357 = vmatpush1.msra.mxu0 0.0
    %1358 = vmatprep.subr.mxu0 0.0
    %1359 = vmatpush1.msra.mxu0 0.0
    %1360 = vmatprep.subr.mxu0 0.0
    %1361 = vmatpush1.msra.mxu0 0.0
    %1362 = vmatprep.subr.mxu0 0.0
    %1363 = vmatpush1.msra.mxu0 0.0
    %1364 = vmatprep.subr.mxu0 0.0
    %1365 = vmatpush1.msra.mxu0 0.0
    %1366 = vmatprep.subr.mxu0 0.0
    %1367 = vmatpush1.msra.mxu0 0.0
    %1368 = vmatprep.mubr.f32.mxu0 0.0
    %1369 = vmatmul.mubr.f32.gmra.mrb[0].mxu0 %v1302
    %v1370 = vpop.f32.mrb[0].mxu0
    %v1371 = vadd.f32 0.0, %v1370
    %v1372 = vpop.f32.mrb[0].mxu0
    %1373 = vdwg.mxu0
    %v1374 = vrcp.pop %v1296
    %v1375 = vmul.f32 0.17677669, %v1374
    %v1376 = vmul.f32 %v1371, %v1375
    %1378 = vrot.lane.b32.xlu0 %v1376, 8
    %v1379 = vpop.permute.xlu0 %1378
    %1381 = vst.msk [vmem:[#allocation2 + $0x8] sm:$0xff] %vm702, %v1379
    %1382 = vrot.lane.b32.xlu0 %v193, 112
    %v1383 = vpop.permute.xlu0 %1382
    %1384 = vrot.lane.b32.xlu0 %v279, 112
    %v1385 = vpop.permute.xlu0 %1384
    %v1386 = vsel %vm368, %v1383, 0
    %v1388 = vsel %vm368, %v1385, 0
    %1390 = vmatprep.subr.mxu0 0.0
    %1391 = vmatpush1.xpose.msra.mxu0 %v1388
    %1392 = vmatprep.subr.mxu0 0.0
    %1393 = vmatpush1.xpose.msra.mxu0 0.0
    %1394 = vmatprep.subr.mxu0 0.0
    %1395 = vmatpush1.xpose.msra.mxu0 0.0
    %1396 = vmatprep.subr.mxu0 0.0
    %1397 = vmatpush1.xpose.msra.mxu0 0.0
    %1398 = vmatprep.subr.mxu0 0.0
    %1399 = vmatpush1.xpose.msra.mxu0 0.0
    %1400 = vmatprep.subr.mxu0 0.0
    %1401 = vmatpush1.xpose.msra.mxu0 0.0
    %1402 = vmatprep.subr.mxu0 0.0
    %1403 = vmatpush1.xpose.msra.mxu0 0.0
    %1404 = vmatprep.subr.mxu0 0.0
    %1405 = vmatpush1.xpose.msra.mxu0 0.0
    %1406 = vmatprep.subr.mxu0 0.0
    %1407 = vmatpush1.xpose.msra.mxu0 0.0
    %1408 = vmatprep.subr.mxu0 0.0
    %1409 = vmatpush1.xpose.msra.mxu0 0.0
    %1410 = vmatprep.subr.mxu0 0.0
    %1411 = vmatpush1.xpose.msra.mxu0 0.0
    %1412 = vmatprep.subr.mxu0 0.0
    %1413 = vmatpush1.xpose.msra.mxu0 0.0
    %1414 = vmatprep.subr.mxu0 0.0
    %1415 = vmatpush1.xpose.msra.mxu0 0.0
    %1416 = vmatprep.subr.mxu0 0.0
    %1417 = vmatpush1.xpose.msra.mxu0 0.0
    %1418 = vmatprep.subr.mxu0 0.0
    %1419 = vmatpush1.xpose.msra.mxu0 0.0
    %1420 = vmatprep.subr.mxu0 0.0
    %1421 = vmatpush1.xpose.msra.mxu0 0.0
    %1422 = vmatprep.subr.mxu0 0.0
    %1423 = vmatpush1.xpose.msra.mxu0 0.0
    %1424 = vmatprep.subr.mxu0 0.0
    %1425 = vmatpush1.xpose.msra.mxu0 0.0
    %1426 = vmatprep.subr.mxu0 0.0
    %1427 = vmatpush1.xpose.msra.mxu0 0.0
    %1428 = vmatprep.subr.mxu0 0.0
    %1429 = vmatpush1.xpose.msra.mxu0 0.0
    %1430 = vmatprep.subr.mxu0 0.0
    %1431 = vmatpush1.xpose.msra.mxu0 0.0
    %1432 = vmatprep.subr.mxu0 0.0
    %1433 = vmatpush1.xpose.msra.mxu0 0.0
    %1434 = vmatprep.subr.mxu0 0.0
    %1435 = vmatpush1.xpose.msra.mxu0 0.0
    %1436 = vmatprep.subr.mxu0 0.0
    %1437 = vmatpush1.xpose.msra.mxu0 0.0
    %1438 = vmatprep.subr.mxu0 0.0
    %1439 = vmatpush1.xpose.msra.mxu0 0.0
    %1440 = vmatprep.subr.mxu0 0.0
    %1441 = vmatpush1.xpose.msra.mxu0 0.0
    %1442 = vmatprep.subr.mxu0 0.0
    %1443 = vmatpush1.xpose.msra.mxu0 0.0
    %1444 = vmatprep.subr.mxu0 0.0
    %1445 = vmatpush1.xpose.msra.mxu0 0.0
    %1446 = vmatprep.subr.mxu0 0.0
    %1447 = vmatpush1.xpose.msra.mxu0 0.0
    %1448 = vmatprep.subr.mxu0 0.0
    %1449 = vmatpush1.xpose.msra.mxu0 0.0
    %1450 = vmatprep.subr.mxu0 0.0
    %1451 = vmatpush1.xpose.msra.mxu0 0.0
    %1452 = vmatprep.subr.mxu0 0.0
    %1453 = vmatpush1.xpose.msra.mxu0 0.0
    %1454 = vmatprep.mubr.f32.mxu0 0.0
    %1455 = vmatmul.mubr.f32.gmra.mrb[0].mxu0 %v1386
    %v1456 = vpop.f32.mrb[0].mxu0
    %v1457 = vadd.f32 0.0, %v1456
    %v1458 = vpop.f32.mrb[0].mxu0
    %1459 = vdwg.mxu0
    %v1460 = vsel %vm368, %v1457, -inf
    %1461 = vmax.xlane.f32.xlu0 %v1460
    %v1462 = vpop.xlane.xlu0 %1461
    %v1463 = vsub.f32 %v1457, %v1462
    %v1464 = vmul.f32 %v1463, 1.442695
    %v1465 = vpow.pop %v1464
    %v1466 = vsel %vm368, %v1465, 0.0
    %1467 = vadd.xlane.f32.xlu0 %v1466
    %v1468 = vpop.xlane.xlu0 %1467
    %1469 = vrot.lane.b32.xlu0 %v365, 112
    %v1470 = vpop.permute.xlu0 %1469
    %v1473 = vsel %vm368, %v1465, 0
    %1475 = vmatprep.subr.mxu0 0.0
    %1476 = vmatpush1.msra.mxu0 %v1470
    %1477 = vmatprep.subr.mxu0 0.0
    %1478 = vmatpush1.msra.mxu0 0.0
    %1479 = vmatprep.subr.mxu0 0.0
    %1480 = vmatpush1.msra.mxu0 0.0
    %1481 = vmatprep.subr.mxu0 0.0
    %1482 = vmatpush1.msra.mxu0 0.0
    %1483 = vmatprep.subr.mxu0 0.0
    %1484 = vmatpush1.msra.mxu0 0.0
    %1485 = vmatprep.subr.mxu0 0.0
    %1486 = vmatpush1.msra.mxu0 0.0
    %1487 = vmatprep.subr.mxu0 0.0
    %1488 = vmatpush1.msra.mxu0 0.0
    %1489 = vmatprep.subr.mxu0 0.0
    %1490 = vmatpush1.msra.mxu0 0.0
    %1491 = vmatprep.subr.mxu0 0.0
    %1492 = vmatpush1.msra.mxu0 0.0
    %1493 = vmatprep.subr.mxu0 0.0
    %1494 = vmatpush1.msra.mxu0 0.0
    %1495 = vmatprep.subr.mxu0 0.0
    %1496 = vmatpush1.msra.mxu0 0.0
    %1497 = vmatprep.subr.mxu0 0.0
    %1498 = vmatpush1.msra.mxu0 0.0
    %1499 = vmatprep.subr.mxu0 0.0
    %1500 = vmatpush1.msra.mxu0 0.0
    %1501 = vmatprep.subr.mxu0 0.0
    %1502 = vmatpush1.msra.mxu0 0.0
    %1503 = vmatprep.subr.mxu0 0.0
    %1504 = vmatpush1.msra.mxu0 0.0
    %1505 = vmatprep.subr.mxu0 0.0
    %1506 = vmatpush1.msra.mxu0 0.0
    %1507 = vmatprep.subr.mxu0 0.0
    %1508 = vmatpush1.msra.mxu0 0.0
    %1509 = vmatprep.subr.mxu0 0.0
    %1510 = vmatpush1.msra.mxu0 0.0
    %1511 = vmatprep.subr.mxu0 0.0
    %1512 = vmatpush1.msra.mxu0 0.0
    %1513 = vmatprep.subr.mxu0 0.0
    %1514 = vmatpush1.msra.mxu0 0.0
    %1515 = vmatprep.subr.mxu0 0.0
    %1516 = vmatpush1.msra.mxu0 0.0
    %1517 = vmatprep.subr.mxu0 0.0
    %1518 = vmatpush1.msra.mxu0 0.0
    %1519 = vmatprep.subr.mxu0 0.0
    %1520 = vmatpush1.msra.mxu0 0.0
    %1521 = vmatprep.subr.mxu0 0.0
    %1522 = vmatpush1.msra.mxu0 0.0
    %1523 = vmatprep.subr.mxu0 0.0
    %1524 = vmatpush1.msra.mxu0 0.0
    %1525 = vmatprep.subr.mxu0 0.0
    %1526 = vmatpush1.msra.mxu0 0.0
    %1527 = vmatprep.subr.mxu0 0.0
    %1528 = vmatpush1.msra.mxu0 0.0
    %1529 = vmatprep.subr.mxu0 0.0
    %1530 = vmatpush1.msra.mxu0 0.0
    %1531 = vmatprep.subr.mxu0 0.0
    %1532 = vmatpush1.msra.mxu0 0.0
    %1533 = vmatprep.subr.mxu0 0.0
    %1534 = vmatpush1.msra.mxu0 0.0
    %1535 = vmatprep.subr.mxu0 0.0
    %1536 = vmatpush1.msra.mxu0 0.0
    %1537 = vmatprep.subr.mxu0 0.0
    %1538 = vmatpush1.msra.mxu0 0.0
    %1539 = vmatprep.mubr.f32.mxu0 0.0
    %1540 = vmatmul.mubr.f32.gmra.mrb[0].mxu0 %v1473
    %v1541 = vpop.f32.mrb[0].mxu0
    %v1542 = vadd.f32 0.0, %v1541
    %v1543 = vpop.f32.mrb[0].mxu0
    %1544 = vdwg.mxu0
    %v1545 = vrcp.pop %v1468
    %v1546 = vmul.f32 0.17677669, %v1545
    %v1547 = vmul.f32 %v1542, %v1546
    %1549 = vrot.lane.b32.xlu0 %v1547, 16
    %v1550 = vpop.permute.xlu0 %1549
    %1552 = vst.msk [vmem:[#allocation2 + $0x8] sm:$0xff] %vm874, %v1550
    %1553 = vrot.lane.b32.xlu0 %v193, 104
    %v1554 = vpop.permute.xlu0 %1553
    %1555 = vrot.lane.b32.xlu0 %v279, 104
    %v1556 = vpop.permute.xlu0 %1555
    %v1557 = vsel %vm368, %v1554, 0
    %v1559 = vsel %vm368, %v1556, 0
    %1561 = vmatprep.subr.mxu0 0.0
    %1562 = vmatpush1.xpose.msra.mxu0 %v1559
    %1563 = vmatprep.subr.mxu0 0.0
    %1564 = vmatpush1.xpose.msra.mxu0 0.0
    %1565 = vmatprep.subr.mxu0 0.0
    %1566 = vmatpush1.xpose.msra.mxu0 0.0
    %1567 = vmatprep.subr.mxu0 0.0
    %1568 = vmatpush1.xpose.msra.mxu0 0.0
    %1569 = vmatprep.subr.mxu0 0.0
    %1570 = vmatpush1.xpose.msra.mxu0 0.0
    %1571 = vmatprep.subr.mxu0 0.0
    %1572 = vmatpush1.xpose.msra.mxu0 0.0
    %1573 = vmatprep.subr.mxu0 0.0
    %1574 = vmatpush1.xpose.msra.mxu0 0.0
    %1575 = vmatprep.subr.mxu0 0.0
    %1576 = vmatpush1.xpose.msra.mxu0 0.0
    %1577 = vmatprep.subr.mxu0 0.0
    %1578 = vmatpush1.xpose.msra.mxu0 0.0
    %1579 = vmatprep.subr.mxu0 0.0
    %1580 = vmatpush1.xpose.msra.mxu0 0.0
    %1581 = vmatprep.subr.mxu0 0.0
    %1582 = vmatpush1.xpose.msra.mxu0 0.0
    %1583 = vmatprep.subr.mxu0 0.0
    %1584 = vmatpush1.xpose.msra.mxu0 0.0
    %1585 = vmatprep.subr.mxu0 0.0
    %1586 = vmatpush1.xpose.msra.mxu0 0.0
    %1587 = vmatprep.subr.mxu0 0.0
    %1588 = vmatpush1.xpose.msra.mxu0 0.0
    %1589 = vmatprep.subr.mxu0 0.0
    %1590 = vmatpush1.xpose.msra.mxu0 0.0
    %1591 = vmatprep.subr.mxu0 0.0
    %1592 = vmatpush1.xpose.msra.mxu0 0.0
    %1593 = vmatprep.subr.mxu0 0.0
    %1594 = vmatpush1.xpose.msra.mxu0 0.0
    %1595 = vmatprep.subr.mxu0 0.0
    %1596 = vmatpush1.xpose.msra.mxu0 0.0
    %1597 = vmatprep.subr.mxu0 0.0
    %1598 = vmatpush1.xpose.msra.mxu0 0.0
    %1599 = vmatprep.subr.mxu0 0.0
    %1600 = vmatpush1.xpose.msra.mxu0 0.0
    %1601 = vmatprep.subr.mxu0 0.0
    %1602 = vmatpush1.xpose.msra.mxu0 0.0
    %1603 = vmatprep.subr.mxu0 0.0
    %1604 = vmatpush1.xpose.msra.mxu0 0.0
    %1605 = vmatprep.subr.mxu0 0.0
    %1606 = vmatpush1.xpose.msra.mxu0 0.0
    %1607 = vmatprep.subr.mxu0 0.0
    %1608 = vmatpush1.xpose.msra.mxu0 0.0
    %1609 = vmatprep.subr.mxu0 0.0
    %1610 = vmatpush1.xpose.msra.mxu0 0.0
    %1611 = vmatprep.subr.mxu0 0.0
    %1612 = vmatpush1.xpose.msra.mxu0 0.0
    %1613 = vmatprep.subr.mxu0 0.0
    %1614 = vmatpush1.xpose.msra.mxu0 0.0
    %1615 = vmatprep.subr.mxu0 0.0
    %1616 = vmatpush1.xpose.msra.mxu0 0.0
    %1617 = vmatprep.subr.mxu0 0.0
    %1618 = vmatpush1.xpose.msra.mxu0 0.0
    %1619 = vmatprep.subr.mxu0 0.0
    %1620 = vmatpush1.xpose.msra.mxu0 0.0
    %1621 = vmatprep.subr.mxu0 0.0
    %1622 = vmatpush1.xpose.msra.mxu0 0.0
    %1623 = vmatprep.subr.mxu0 0.0
    %1624 = vmatpush1.xpose.msra.mxu0 0.0
    %1625 = vmatprep.mubr.f32.mxu0 0.0
    %1626 = vmatmul.mubr.f32.gmra.mrb[0].mxu0 %v1557
    %v1627 = vpop.f32.mrb[0].mxu0
    %v1628 = vadd.f32 0.0, %v1627
    %v1629 = vpop.f32.mrb[0].mxu0
    %1630 = vdwg.mxu0
    %v1631 = vsel %vm368, %v1628, -inf
    %1632 = vmax.xlane.f32.xlu0 %v1631
    %v1633 = vpop.xlane.xlu0 %1632
    %v1634 = vsub.f32 %v1628, %v1633
    %v1635 = vmul.f32 %v1634, 1.442695
    %v1636 = vpow.pop %v1635
    %v1637 = vsel %vm368, %v1636, 0.0
    %1638 = vadd.xlane.f32.xlu0 %v1637
    %v1639 = vpop.xlane.xlu0 %1638
    %1640 = vrot.lane.b32.xlu0 %v365, 104
    %v1641 = vpop.permute.xlu0 %1640
    %v1644 = vsel %vm368, %v1636, 0
    %1646 = vmatprep.subr.mxu0 0.0
    %1647 = vmatpush1.msra.mxu0 %v1641
    %1648 = vmatprep.subr.mxu0 0.0
    %1649 = vmatpush1.msra.mxu0 0.0
    %1650 = vmatprep.subr.mxu0 0.0
    %1651 = vmatpush1.msra.mxu0 0.0
    %1652 = vmatprep.subr.mxu0 0.0
    %1653 = vmatpush1.msra.mxu0 0.0
    %1654 = vmatprep.subr.mxu0 0.0
    %1655 = vmatpush1.msra.mxu0 0.0
    %1656 = vmatprep.subr.mxu0 0.0
    %1657 = vmatpush1.msra.mxu0 0.0
    %1658 = vmatprep.subr.mxu0 0.0
    %1659 = vmatpush1.msra.mxu0 0.0
    %1660 = vmatprep.subr.mxu0 0.0
    %1661 = vmatpush1.msra.mxu0 0.0
    %1662 = vmatprep.subr.mxu0 0.0
    %1663 = vmatpush1.msra.mxu0 0.0
    %1664 = vmatprep.subr.mxu0 0.0
    %1665 = vmatpush1.msra.mxu0 0.0
    %1666 = vmatprep.subr.mxu0 0.0
    %1667 = vmatpush1.msra.mxu0 0.0
    %1668 = vmatprep.subr.mxu0 0.0
    %1669 = vmatpush1.msra.mxu0 0.0
    %1670 = vmatprep.subr.mxu0 0.0
    %1671 = vmatpush1.msra.mxu0 0.0
    %1672 = vmatprep.subr.mxu0 0.0
    %1673 = vmatpush1.msra.mxu0 0.0
    %1674 = vmatprep.subr.mxu0 0.0
    %1675 = vmatpush1.msra.mxu0 0.0
    %1676 = vmatprep.subr.mxu0 0.0
    %1677 = vmatpush1.msra.mxu0 0.0
    %1678 = vmatprep.subr.mxu0 0.0
    %1679 = vmatpush1.msra.mxu0 0.0
    %1680 = vmatprep.subr.mxu0 0.0
    %1681 = vmatpush1.msra.mxu0 0.0
    %1682 = vmatprep.subr.mxu0 0.0
    %1683 = vmatpush1.msra.mxu0 0.0
    %1684 = vmatprep.subr.mxu0 0.0
    %1685 = vmatpush1.msra.mxu0 0.0
    %1686 = vmatprep.subr.mxu0 0.0
    %1687 = vmatpush1.msra.mxu0 0.0
    %1688 = vmatprep.subr.mxu0 0.0
    %1689 = vmatpush1.msra.mxu0 0.0
    %1690 = vmatprep.subr.mxu0 0.0
    %1691 = vmatpush1.msra.mxu0 0.0
    %1692 = vmatprep.subr.mxu0 0.0
    %1693 = vmatpush1.msra.mxu0 0.0
    %1694 = vmatprep.subr.mxu0 0.0
    %1695 = vmatpush1.msra.mxu0 0.0
    %1696 = vmatprep.subr.mxu0 0.0
    %1697 = vmatpush1.msra.mxu0 0.0
    %1698 = vmatprep.subr.mxu0 0.0
    %1699 = vmatpush1.msra.mxu0 0.0
    %1700 = vmatprep.subr.mxu0 0.0
    %1701 = vmatpush1.msra.mxu0 0.0
    %1702 = vmatprep.subr.mxu0 0.0
    %1703 = vmatpush1.msra.mxu0 0.0
    %1704 = vmatprep.subr.mxu0 0.0
    %1705 = vmatpush1.msra.mxu0 0.0
    %1706 = vmatprep.subr.mxu0 0.0
    %1707 = vmatpush1.msra.mxu0 0.0
    %1708 = vmatprep.subr.mxu0 0.0
    %1709 = vmatpush1.msra.mxu0 0.0
    %1710 = vmatprep.mubr.f32.mxu0 0.0
    %1711 = vmatmul.mubr.f32.gmra.mrb[0].mxu0 %v1644
    %v1712 = vpop.f32.mrb[0].mxu0
    %v1713 = vadd.f32 0.0, %v1712
    %v1714 = vpop.f32.mrb[0].mxu0
    %1715 = vdwg.mxu0
    %v1716 = vrcp.pop %v1639
    %v1717 = vmul.f32 0.17677669, %v1716
    %v1718 = vmul.f32 %v1713, %v1717
    %1720 = vrot.lane.b32.xlu0 %v1718, 24
    %v1721 = vpop.permute.xlu0 %1720
    %1723 = vst.msk [vmem:[#allocation2 + $0x8] sm:$0xff] %vm1046, %v1721
    %v1724 = vld [vmem:[#allocation2] sm:$0xff]
    %v1725 = vld [vmem:[#allocation2 + $0x8] sm:$0xff]
    %v1726 = vld [vmem:[#allocation11] sm:$0xff]
    %v1727 = vld [vmem:[#allocation11 + $0x8] sm:$0xff]
    %v1728 = vld [vmem:[#allocation11 + $0x10] sm:$0xff]
    %v1729 = vld [vmem:[#allocation11 + $0x18] sm:$0xff]
    %v1730 = vld [vmem:[%s8] sm:$0x1]
    %v1732 = vlaneseq
    %v1733 = vshrl.u32 %v1732, 7
    %v1734 = vsub.s32 0, %v1733
    %v1735 = vrot.slane %v1730, %v1734
    %v1738 = vsel %vm114, %v1724, 0
    %v1741 = vsel %vm114, %v1725, 0
    %1743 = vmatprep.subr.mxu0 0.0
    %1744 = vmatpush1.msra.mxu0 %v1726
    %1745 = vmatprep.subr.mxu0 0.0
    %1746 = vmatpush1.msra.mxu0 %v1727
    %1747 = vmatprep.subr.mxu0 0.0
    %1748 = vmatpush1.msra.mxu0 %v1728
    %1749 = vmatprep.subr.mxu0 0.0
    %1750 = vmatpush1.msra.mxu0 %v1729
    %1751 = vmatprep.subr.mxu0 0.0
    %1752 = vmatpush1.msra.mxu0 0.0
    %1753 = vmatprep.subr.mxu0 0.0
    %1754 = vmatpush1.msra.mxu0 0.0
    %1755 = vmatprep.subr.mxu0 0.0
    %1756 = vmatpush1.msra.mxu0 0.0
    %1757 = vmatprep.subr.mxu0 0.0
    %1758 = vmatpush1.msra.mxu0 0.0
    %1759 = vmatprep.subr.mxu0 0.0
    %1760 = vmatpush1.msra.mxu0 0.0
    %1761 = vmatprep.subr.mxu0 0.0
    %1762 = vmatpush1.msra.mxu0 0.0
    %1763 = vmatprep.subr.mxu0 0.0
    %1764 = vmatpush1.msra.mxu0 0.0
    %1765 = vmatprep.subr.mxu0 0.0
    %1766 = vmatpush1.msra.mxu0 0.0
    %1767 = vmatprep.subr.mxu0 0.0
    %1768 = vmatpush1.msra.mxu0 0.0
    %1769 = vmatprep.subr.mxu0 0.0
    %1770 = vmatpush1.msra.mxu0 0.0
    %1771 = vmatprep.subr.mxu0 0.0
    %1772 = vmatpush1.msra.mxu0 0.0
    %1773 = vmatprep.subr.mxu0 0.0
    %1774 = vmatpush1.msra.mxu0 0.0
    %1775 = vmatprep.subr.mxu0 0.0
    %1776 = vmatpush1.msra.mxu0 0.0
    %1777 = vmatprep.subr.mxu0 0.0
    %1778 = vmatpush1.msra.mxu0 0.0
    %1779 = vmatprep.subr.mxu0 0.0
    %1780 = vmatpush1.msra.mxu0 0.0
    %1781 = vmatprep.subr.mxu0 0.0
    %1782 = vmatpush1.msra.mxu0 0.0
    %1783 = vmatprep.subr.mxu0 0.0
    %1784 = vmatpush1.msra.mxu0 0.0
    %1785 = vmatprep.subr.mxu0 0.0
    %1786 = vmatpush1.msra.mxu0 0.0
    %1787 = vmatprep.subr.mxu0 0.0
    %1788 = vmatpush1.msra.mxu0 0.0
    %1789 = vmatprep.subr.mxu0 0.0
    %1790 = vmatpush1.msra.mxu0 0.0
    %1791 = vmatprep.subr.mxu0 0.0
    %1792 = vmatpush1.msra.mxu0 0.0
    %1793 = vmatprep.subr.mxu0 0.0
    %1794 = vmatpush1.msra.mxu0 0.0
    %1795 = vmatprep.subr.mxu0 0.0
    %1796 = vmatpush1.msra.mxu0 0.0
    %1797 = vmatprep.subr.mxu0 0.0
    %1798 = vmatpush1.msra.mxu0 0.0
    %1799 = vmatprep.subr.mxu0 0.0
    %1800 = vmatpush1.msra.mxu0 0.0
    %1801 = vmatprep.subr.mxu0 0.0
    %1802 = vmatpush1.msra.mxu0 0.0
    %1803 = vmatprep.subr.mxu0 0.0
    %1804 = vmatpush1.msra.mxu0 0.0
    %1805 = vmatprep.subr.mxu0 0.0
    %1806 = vmatpush1.msra.mxu0 0.0
    %1807 = vmatprep.mubr.f32.mxu0 0.0
    %1808 = vmatmul.mubr.f32.gmra.mrb[0].mxu0 %v1738
    %v1809 = vpop.f32.mrb[0].mxu0
    %v1810 = vadd.f32 %v1735, %v1809
    %v1811 = vpop.f32.mrb[0].mxu0
    %1812 = vmatprep.mubr.f32.mxu0 0.0
    %1813 = vmatmul.mubr.f32.gmra.mrb[0].mxu0 %v1741
    %v1814 = vpop.f32.mrb[0].mxu0
    %v1815 = vadd.f32 %v1735, %v1814
    %v1816 = vpop.f32.mrb[0].mxu0
    %1817 = vdwg.mxu0
    %1818 = vst.msk [vmem:[#allocation12] sm:$0xff] %vm114, %v1810
    %1819 = vst.msk [vmem:[#allocation12 + $0x8] sm:$0xff] %vm114, %v1815
    // Predicated region
    $region58: #{tpu_custom_call.1} parent=1 // pred_check
      _
    $region59: #{tpu_custom_call.1} parent=1 // pred_check_branch
      %1821 = sbr.rel (0) target = $region61
    $region60: #{tpu_custom_call.1} parent=1 // pred_region
      %s1823 = ssub.s32 256, 256
      %1824 = vsyncadd [#allocation5], %s1823
      %s1825 = sshll.u32 [#allocation12], 4
      %s1826 = int_to_ptr.vmem [resolvable:$true] %s1825
      %1831 = dma.vmem_to_hbm [thread:$0]  %s1826, 256, %s9, [#allocation5], 128, 128, 8
    $region61: #{tpu_custom_call.1} parent=1 // pred_fallthru
      _
    // Predicated region
    $region62: #{tpu_custom_call.1} parent=1 // pred_check
      _
    $region63: #{tpu_custom_call.1} parent=1 // pred_check_branch
      %1833 = sbr.rel (0) target = $region65
    $region64: #{tpu_custom_call.1} parent=1 // pred_region
      %1834 = dma.done [#allocation5], 256
    $region65: #{tpu_custom_call.1} parent=1 // pred_fallthru
      _
    %1835 = vsyncpa [#allocation4], 1
    %1836 = vsyncpa [#allocation7], 1
    %1837 = vsyncpa [#allocation10], 1
    %1838 = vsyncpa [#allocation5], 1

</llo_original>
